<compile_context>
chip_gen: v6e
topology: v6e:2x2x1
jax: 0.10.0
libtpu: 0.0.40
codegen_flags: <defaults>
</compile_context>

<pallas_src>
import math

import jax
import jax.numpy as jnp
from jax.experimental import pallas as pl
from jax.experimental.pallas import tpu as pltpu


def _round_up(v, m):
    return ((v + m - 1) // m) * m


def _pad_gate_dim(w, H, Hp):
    """Pad the trailing (3H) gate axis so each gate occupies its own Hp-lane block."""
    lead = w.shape[:-1]
    w3 = w.reshape(lead + (3, H))
    pad = [(0, 0)] * len(lead) + [(0, 0), (0, Hp - H)]
    return jnp.pad(w3, pad).reshape(lead + (3 * Hp,))


def gru_kernel(x_ref, wih_ref, whh_rz_ref, whh_n_ref, bih_ref, bhh_rz_ref,
               bhh_n_ref, h0_ref, out_ref, h_scratch, gi_scratch):
    """One (batch-block, time-chunk) grid step of the GRU.

    x_ref:      (Tc*Bb, E)   bf16 inputs for this chunk (batch-major rows)
    wih_ref:    (E, 3*Hp)    bf16, per-gate lane padded, order [r|z|n]
    whh_rz_ref: (Hp, 2*Hp)   bf16 hidden->gate weights for [r|z]
    whh_n_ref:  (Hp, Hp)     bf16 hidden->gate weights for [n]
    bih_ref:    (1, 3*Hp)    f32
    bhh_rz_ref: (1, 2*Hp)    f32
    bhh_n_ref:  (1, Hp)      f32
    h0_ref:     (Bb, Hp)     f32 initial hidden state for this batch block
    out_ref:    (Tc, Bb, Hp) f32 per-step hidden states
    h_scratch:  (Bb, Hp)     f32 hidden carried across time chunks
    gi_scratch: (Tc*Bb, 3*Hp) f32 hoisted input projection for the chunk
    """
    Tc, Bb, Hp = out_ref.shape

    # Start of a new batch block's recurrence: (re-)initialize the carried h.
    @pl.when(pl.program_id(1) == 0)
    def _():
        h_scratch[...] = h0_ref[...]

    # Hoisted input projection for the whole chunk: one MXU matmul, bf16
    # operands, f32 accumulate; parked in VMEM so it does not stay in vregs.
    gi = jnp.dot(x_ref[...], wih_ref[...], preferred_element_type=jnp.float32)
    gi_scratch[...] = gi + bih_ref[...]                       # (Tc*Bb, 3Hp)

    # Loop-invariant operands hoisted out of the recurrence (JAX does not CSE
    # broadcast_in_dim).
    wh_rz = whh_rz_ref[...]                                   # (Hp, 2Hp) bf16
    wh_n = whh_n_ref[...]                                     # (Hp, Hp)  bf16
    bh_rz = jnp.broadcast_to(bhh_rz_ref[...], (Bb, 2 * Hp))   # f32
    bh_n = jnp.broadcast_to(bhh_n_ref[...], (Bb, Hp))         # f32

    def step(t, h):
        row0 = pl.multiple_of(t * Bb, 8)                      # sublane aligned
        gi_t = gi_scratch[pl.ds(row0, Bb), :]                 # (Bb, 3Hp) f32
        h_b = h.astype(jnp.bfloat16)

        # Split hidden matmul: r/z sigmoids (EUP) overlap the n-gate MXU push.
        gh_rz = jnp.dot(h_b, wh_rz, preferred_element_type=jnp.float32) + bh_rz
        r = jax.nn.sigmoid(gi_t[:, 0 * Hp:1 * Hp] + gh_rz[:, 0 * Hp:1 * Hp])
        z = jax.nn.sigmoid(gi_t[:, 1 * Hp:2 * Hp] + gh_rz[:, 1 * Hp:2 * Hp])

        gh_n = jnp.dot(h_b, wh_n, preferred_element_type=jnp.float32) + bh_n
        n = jnp.tanh(gi_t[:, 2 * Hp:3 * Hp] + r * gh_n)

        h_new = n + z * (h - n)                               # == (1-z)*n + z*h
        out_ref[t] = h_new.astype(out_ref.dtype)              # dense (Bb,Hp) tile
        return h_new

    h_scratch[...] = jax.lax.fori_loop(0, Tc, step, h_scratch[...],
                                       unroll=min(Tc, 8))


def encoder_forward(x_in, params, hidden=None):
    """Pallas GRU encoder.

    x_in:   (T, B, E) float32 (seq-first, PyTorch nn.GRU default layout)
    params: dict with w_ih (E, 3H), w_hh (H, 3H), b_ih (1, 3H), b_hh (1, 3H)
    hidden: optional (1, B, H) initial hidden; zeros if None (PyTorch semantics).
    Returns (outputs (T, B, H), last_hidden (1, B, H)).
    """
    T, B, E = x_in.shape
    H = params["w_hh"].shape[0]

    # --- tiling choices ------------------------------------------------------
    # Split batch across the two v7x TensorCores only when each half still has
    # >= 128 MXU rows; otherwise one block (splitting just serializes on 1-TC
    # chips).
    n_b_blocks = 2 if B >= 256 else 1
    Bb = _round_up(pl.cdiv(B, n_b_blocks), 8)     # sublane tile per batch block
    Bp = Bb * n_b_blocks
    Hp = _round_up(H, 128)                        # lane tile (per gate)
    n_t_chunks = pl.cdiv(T, 32)                   # time chunk <= 32 steps
    Tc = pl.cdiv(T, n_t_chunks)
    Tp = Tc * n_t_chunks

    # --- operand layout (pad only when needed to avoid extra HBM passes) ----
    x_p = x_in.astype(jnp.bfloat16)
    if (Tp != T) or (Bp != B):
        x_p = jnp.pad(x_p, ((0, Tp - T), (0, Bp - B), (0, 0)))
    if n_b_blocks > 1:
        # Batch-major layout so every (batch-block, time-chunk) tile is a
        # contiguous row range (only taken on the large-B / dual-TC path).
        x_p = x_p.reshape(Tp, n_b_blocks, Bb, E).transpose(1, 0, 2, 3)
    x_p = x_p.reshape(n_b_blocks * Tp * Bb, E)

    if hidden is None:
        h0_p = jnp.zeros((Bp, Hp), jnp.float32)
    else:
        h0_p = hidden[0].astype(jnp.float32)
        if (Bp != B) or (Hp != H):
            h0_p = jnp.pad(h0_p, ((0, Bp - B), (0, Hp - H)))

    w_ih_p = _pad_gate_dim(params["w_ih"].astype(jnp.float32), H, Hp)
    w_ih_p = w_ih_p.astype(jnp.bfloat16)                                # (E, 3Hp)
    w_hh_p = _pad_gate_dim(params["w_hh"].astype(jnp.float32), H, Hp)
    w_hh_p = jnp.pad(w_hh_p, ((0, Hp - H), (0, 0))).astype(jnp.bfloat16)  # (Hp, 3Hp)
    w_hh_rz = w_hh_p[:, :2 * Hp]                                        # (Hp, 2Hp)
    w_hh_n = w_hh_p[:, 2 * Hp:]                                         # (Hp, Hp)
    b_ih_p = _pad_gate_dim(params["b_ih"].astype(jnp.float32), H, Hp)   # (1, 3Hp)
    b_hh_p = _pad_gate_dim(params["b_hh"].astype(jnp.float32), H, Hp)   # (1, 3Hp)
    b_hh_rz = b_hh_p[:, :2 * Hp]
    b_hh_n = b_hh_p[:, 2 * Hp:]

    # --- VMEM budget (per-generation explicit limit; BlockSpec double-buffers)
    blk_x = Tc * Bb * E * 2
    blk_out = Tc * Bb * Hp * 4
    blk_w = (E * 3 * Hp + Hp * 3 * Hp) * 2 + 6 * Hp * 4
    blk_h0 = Bb * Hp * 4
    scratch_bytes = Bb * Hp * 4 + Tc * Bb * 3 * Hp * 4
    vmem_est = 2 * (blk_x + blk_out + blk_h0 + blk_w) + scratch_bytes + (2 << 20)
    vmem_limit = int(min(max(vmem_est, 8 << 20), 64 << 20))

    grid_spec = pltpu.PrefetchScalarGridSpec(
        num_scalar_prefetch=0,
        grid=(n_b_blocks, n_t_chunks),
        in_specs=[
            pl.BlockSpec((Tc * Bb, E), lambda b, t: (b * n_t_chunks + t, 0)),  # x
            pl.BlockSpec((E, 3 * Hp), lambda b, t: (0, 0)),                    # w_ih
            pl.BlockSpec((Hp, 2 * Hp), lambda b, t: (0, 0)),                   # w_hh[r|z]
            pl.BlockSpec((Hp, Hp), lambda b, t: (0, 0)),                       # w_hh[n]
            pl.BlockSpec((1, 3 * Hp), lambda b, t: (0, 0)),                    # b_ih
            pl.BlockSpec((1, 2 * Hp), lambda b, t: (0, 0)),                    # b_hh[r|z]
            pl.BlockSpec((1, Hp), lambda b, t: (0, 0)),                        # b_hh[n]
            pl.BlockSpec((Bb, Hp), lambda b, t: (b, 0)),                       # h0
        ],
        out_specs=pl.BlockSpec((Tc, Bb, Hp), lambda b, t: (t, b, 0)),
        scratch_shapes=[
            pltpu.VMEM((Bb, Hp), jnp.float32),             # carried hidden state
            pltpu.VMEM((Tc * Bb, 3 * Hp), jnp.float32),    # per-chunk GI
        ],
    )

    out_p = pl.pallas_call(
        gru_kernel,
        out_shape=jax.ShapeDtypeStruct((Tp, Bp, Hp), jnp.float32),
        grid_spec=grid_spec,
        compiler_params=pltpu.CompilerParams(
            dimension_semantics=("parallel", "arbitrary"),
            vmem_limit_bytes=vmem_limit,
        ),
    )(x_p, w_ih_p, w_hh_rz, w_hh_n, b_ih_p, b_hh_rz, b_hh_n, h0_p)

    outputs = out_p
    if (Tp != T) or (Bp != B) or (Hp != H):
        outputs = out_p[:T, :B, :H]
    last_hidden = outputs[-1:]    # n_layers=1, unidirectional: h_T == outputs[-1]
    return outputs, last_hidden


def init_encoder_params(key, embed_size, hidden_size):
    """Deterministic PyTorch-style init: U(-1/sqrt(H), 1/sqrt(H)), gate order [r,z,n]."""
    k = 1.0 / math.sqrt(hidden_size)
    k1, k2, k3, k4 = jax.random.split(key, 4)
    # PyTorch stores weight_ih_l0 as (3H, E); we store the transpose (E, 3H) for x @ W.
    w_ih = jax.random.uniform(k1, (embed_size, 3 * hidden_size), jnp.float32, -k, k)
    w_hh = jax.random.uniform(k2, (hidden_size, 3 * hidden_size), jnp.float32, -k, k)
    b_ih = jax.random.uniform(k3, (1, 3 * hidden_size), jnp.float32, -k, k)
    b_hh = jax.random.uniform(k4, (1, 3 * hidden_size), jnp.float32, -k, k)
    return {"w_ih": w_ih, "w_hh": w_hh, "b_ih": b_ih, "b_hh": b_hh}


def gru_reference(x_in, params, hidden=None):
    """Pure-JAX f32 reference (lax.scan) for correctness check."""
    T, B, E = x_in.shape
    H = params["w_hh"].shape[0]
    h0 = jnp.zeros((B, H), jnp.float32) if hidden is None else hidden[0]

    def step(h_prev, x_t):
        gi = x_t @ params["w_ih"] + params["b_ih"]
        gh = h_prev @ params["w_hh"] + params["b_hh"]
        i_r, i_z, i_n = gi[:, :H], gi[:, H:2 * H], gi[:, 2 * H:]
        h_r, h_z, h_n = gh[:, :H], gh[:, H:2 * H], gh[:, 2 * H:]
        r = jax.nn.sigmoid(i_r + h_r)
        z = jax.nn.sigmoid(i_z + h_z)
        n = jnp.tanh(i_n + r * h_n)
        h_new = (1.0 - z) * n + z * h_prev
        return h_new, h_new

    h_last, outs = jax.lax.scan(step, h0, x_in)
    return outs, h_last[None]


if __name__ == "__main__":
    T, B = 8, 2             # seq_len, batch
    EMBED, HIDDEN = 16, 32  # embed_size, hidden_size

    key = jax.random.PRNGKey(0)
    k_x, k_p = jax.random.split(key)
    x_in = jax.random.normal(k_x, (T, B, EMBED), jnp.float32)
    params = init_encoder_params(k_p, EMBED, HIDDEN)

    outputs, last_hidden = encoder_forward(x_in, params, hidden=None)
    outputs = jax.block_until_ready(outputs)
    last_hidden = jax.block_until_ready(last_hidden)

    ref_out, ref_last = gru_reference(x_in, params, hidden=None)
    assert outputs.shape == (T, B, HIDDEN)
    assert last_hidden.shape == (1, B, HIDDEN)
    # bf16 matmul operands (f32 accumulate) => relaxed tolerance vs f32 reference.
    assert jnp.allclose(outputs, ref_out, atol=5e-2, rtol=5e-2)
    assert jnp.allclose(last_hidden, ref_last, atol=5e-2, rtol=5e-2)

    print("KERNEL_OK")
</pallas_src>

<mosaic_0001>
module attributes {stable_mosaic.version = 11 : i64} {
  func.func @gru_kernel(%arg0: i32, %arg1: i32, %arg2: memref<64x16xbf16, #tpu.memory_space<vmem>>, %arg3: memref<16x384xbf16, #tpu.memory_space<vmem>>, %arg4: memref<128x256xbf16, #tpu.memory_space<vmem>>, %arg5: memref<128x128xbf16, #tpu.memory_space<vmem>>, %arg6: memref<1x384xf32, #tpu.memory_space<vmem>>, %arg7: memref<1x256xf32, #tpu.memory_space<vmem>>, %arg8: memref<1x128xf32, #tpu.memory_space<vmem>>, %arg9: memref<8x128xf32, #tpu.memory_space<vmem>>, %arg10: memref<8x8x128xf32, #tpu.memory_space<vmem>>, %arg11: memref<8x128xf32, #tpu.memory_space<vmem>>, %arg12: memref<64x384xf32, #tpu.memory_space<vmem>>) attributes {dimension_semantics = [#tpu.dimension_semantics<parallel>, #tpu.dimension_semantics<arbitrary>], iteration_bounds = array<i64: 1, 1>, scalar_prefetch = 0 : i64, scratch_operands = 2 : i64, tpu.core_type = #tpu.core_type<tc>, window_params = [{transform_indices = @transform_0, window_bounds = array<i64: 64, 16>}, {pipeline_mode = #tpu.pipeline_mode<synchronous>, transform_indices = @transform_1, window_bounds = array<i64: 16, 384>}, {pipeline_mode = #tpu.pipeline_mode<synchronous>, transform_indices = @transform_2, window_bounds = array<i64: 128, 256>}, {pipeline_mode = #tpu.pipeline_mode<synchronous>, transform_indices = @transform_3, window_bounds = array<i64: 128, 128>}, {pipeline_mode = #tpu.pipeline_mode<synchronous>, transform_indices = @transform_4, window_bounds = array<i64: 1, 384>}, {pipeline_mode = #tpu.pipeline_mode<synchronous>, transform_indices = @transform_5, window_bounds = array<i64: 1, 256>}, {pipeline_mode = #tpu.pipeline_mode<synchronous>, transform_indices = @transform_6, window_bounds = array<i64: 1, 128>}, {transform_indices = @transform_7, window_bounds = array<i64: 8, 128>}, {transform_indices = @transform_8, window_bounds = array<i64: 8, 8, 128>}]} {
    %c0_i32 = arith.constant 0 : i32
    %0 = arith.cmpi eq, %arg1, %c0_i32 : i32
    %1 = arith.extui %0 : i1 to i32
    %c0_i32_0 = arith.constant 0 : i32
    %2 = arith.cmpi ne, %1, %c0_i32_0 : i32
    scf.if %2 {
      %c0_85 = arith.constant 0 : index
      %c0_86 = arith.constant 0 : index
      %308 = vector.load %arg9[%c0_85, %c0_86] : memref<8x128xf32, #tpu.memory_space<vmem>>, vector<8x128xf32>
      %c0_87 = arith.constant 0 : index
      %c0_88 = arith.constant 0 : index
      %309 = vector.load %arg11[%c0_87, %c0_88] : memref<8x128xf32, #tpu.memory_space<vmem>>, vector<8x128xf32>
      tpu.vector_store %arg11[%c0_87, %c0_88], %308 {strides = array<i32>} : memref<8x128xf32, #tpu.memory_space<vmem>>, vector<8x128xf32>,
    } else {
    }
    %c0 = arith.constant 0 : index
    %c0_1 = arith.constant 0 : index
    %3 = vector.load %arg2[%c0, %c0_1] : memref<64x16xbf16, #tpu.memory_space<vmem>>, vector<64x16xbf16>
    %c0_2 = arith.constant 0 : index
    %c0_3 = arith.constant 0 : index
    %4 = vector.load %arg3[%c0_2, %c0_3] : memref<16x384xbf16, #tpu.memory_space<vmem>>, vector<16x384xbf16>
    %cst = arith.constant dense<0.000000e+00> : vector<64x384xf32>
    %5 = tpu.matmul %3, %4, %cst {dimension_numbers = #tpu.dot_dimension_numbers<[1], [0], [0], [1], [0, 0, 1, 1], [], []>} : vector<64x16xbf16>, vector<16x384xbf16>, vector<64x384xf32> -> vector<64x384xf32>
    %c0_4 = arith.constant 0 : index
    %c0_5 = arith.constant 0 : index
    %6 = vector.load %arg6[%c0_4, %c0_5] : memref<1x384xf32, #tpu.memory_space<vmem>>, vector<1x384xf32>
    %7 = vector.broadcast %6 : vector<1x384xf32> to vector<64x384xf32>
    %8 = arith.addf %5, %7 : vector<64x384xf32>
    %c0_6 = arith.constant 0 : index
    %c0_7 = arith.constant 0 : index
    %9 = vector.load %arg12[%c0_6, %c0_7] : memref<64x384xf32, #tpu.memory_space<vmem>>, vector<64x384xf32>
    tpu.vector_store %arg12[%c0_6, %c0_7], %8 {strides = array<i32>} : memref<64x384xf32, #tpu.memory_space<vmem>>, vector<64x384xf32>,
    %c0_8 = arith.constant 0 : index
    %c0_9 = arith.constant 0 : index
    %10 = vector.load %arg4[%c0_8, %c0_9] : memref<128x256xbf16, #tpu.memory_space<vmem>>, vector<128x256xbf16>
    %c0_10 = arith.constant 0 : index
    %c0_11 = arith.constant 0 : index
    %11 = vector.load %arg5[%c0_10, %c0_11] : memref<128x128xbf16, #tpu.memory_space<vmem>>, vector<128x128xbf16>
    %c0_12 = arith.constant 0 : index
    %c0_13 = arith.constant 0 : index
    %12 = vector.load %arg7[%c0_12, %c0_13] : memref<1x256xf32, #tpu.memory_space<vmem>>, vector<1x256xf32>
    %13 = vector.shape_cast %12 : vector<1x256xf32> to vector<1x256xf32>
    %14 = vector.broadcast %13 : vector<1x256xf32> to vector<8x256xf32>
    %c0_14 = arith.constant 0 : index
    %c0_15 = arith.constant 0 : index
    %15 = vector.load %arg8[%c0_14, %c0_15] : memref<1x128xf32, #tpu.memory_space<vmem>>, vector<1x128xf32>
    %16 = vector.shape_cast %15 : vector<1x128xf32> to vector<1x128xf32>
    %17 = vector.broadcast %16 : vector<1x128xf32> to vector<8x128xf32>
    %c0_16 = arith.constant 0 : index
    %c0_17 = arith.constant 0 : index
    %18 = vector.load %arg11[%c0_16, %c0_17] : memref<8x128xf32, #tpu.memory_space<vmem>>, vector<8x128xf32>
    %c0_i32_18 = arith.constant 0 : i32
    %c8_i32 = arith.constant 8 : i32
    %19 = arith.muli %c0_i32_18, %c8_i32 : i32
    %20 = tpu.assume_multiple %19, 8 : i32
    %21 = arith.index_cast %20 : i32 to index
    %c0_19 = arith.constant 0 : index
    %22 = vector.load %arg12[%21, %c0_19] : memref<64x384xf32, #tpu.memory_space<vmem>>, vector<8x384xf32>
    %23 = arith.truncf %18 : vector<8x128xf32> to vector<8x128xbf16>
    %cst_20 = arith.constant dense<0.000000e+00> : vector<8x256xf32>
    %24 = tpu.matmul %23, %10, %cst_20 {dimension_numbers = #tpu.dot_dimension_numbers<[1], [0], [0], [1], [0, 0, 1, 1], [], []>} : vector<8x128xbf16>, vector<128x256xbf16>, vector<8x256xf32> -> vector<8x256xf32>
    %25 = arith.addf %24, %14 : vector<8x256xf32>
    %26 = vector.extract_strided_slice %22 {offsets = [0, 0], sizes = [8, 128], strides = [1, 1]} : vector<8x384xf32> to vector<8x128xf32>
    %27 = vector.extract_strided_slice %25 {offsets = [0, 0], sizes = [8, 128], strides = [1, 1]} : vector<8x256xf32> to vector<8x128xf32>
    %28 = arith.addf %26, %27 : vector<8x128xf32>
    %29 = arith.negf %28 : vector<8x128xf32>
    %30 = math.exp %29 : vector<8x128xf32>
    %cst_21 = arith.constant 1.000000e+00 : f32
    %31 = vector.broadcast %cst_21 : f32 to vector<8x128xf32>
    %32 = arith.addf %31, %30 : vector<8x128xf32>
    %33 = arith.divf %31, %32 : vector<8x128xf32>
    %34 = vector.extract_strided_slice %22 {offsets = [0, 128], sizes = [8, 128], strides = [1, 1]} : vector<8x384xf32> to vector<8x128xf32>
    %35 = vector.extract_strided_slice %25 {offsets = [0, 128], sizes = [8, 128], strides = [1, 1]} : vector<8x256xf32> to vector<8x128xf32>
    %36 = arith.addf %34, %35 : vector<8x128xf32>
    %37 = arith.negf %36 : vector<8x128xf32>
    %38 = math.exp %37 : vector<8x128xf32>
    %cst_22 = arith.constant 1.000000e+00 : f32
    %39 = vector.broadcast %cst_22 : f32 to vector<8x128xf32>
    %40 = arith.addf %39, %38 : vector<8x128xf32>
    %41 = arith.divf %39, %40 : vector<8x128xf32>
    %cst_23 = arith.constant dense<0.000000e+00> : vector<8x128xf32>
    %42 = tpu.matmul %23, %11, %cst_23 {dimension_numbers = #tpu.dot_dimension_numbers<[1], [0], [0], [1], [0, 0, 1, 1], [], []>} : vector<8x128xbf16>, vector<128x128xbf16>, vector<8x128xf32> -> vector<8x128xf32>
    %43 = arith.addf %42, %17 : vector<8x128xf32>
    %44 = vector.extract_strided_slice %22 {offsets = [0, 256], sizes = [8, 128], strides = [1, 1]} : vector<8x384xf32> to vector<8x128xf32>
    %45 = arith.mulf %33, %43 : vector<8x128xf32>
    %46 = arith.addf %44, %45 : vector<8x128xf32>
    %47 = math.tanh %46 : vector<8x128xf32>
    %48 = arith.subf %18, %47 : vector<8x128xf32>
    %49 = arith.mulf %41, %48 : vector<8x128xf32>
    %50 = arith.addf %47, %49 : vector<8x128xf32>
    %51 = arith.index_cast %c0_i32_18 : i32 to index
    %c0_24 = arith.constant 0 : index
    %c0_25 = arith.constant 0 : index
    %52 = vector.load %arg10[%51, %c0_24, %c0_25] : memref<8x8x128xf32, #tpu.memory_space<vmem>>, vector<1x8x128xf32>
    %53 = vector.shape_cast %52 : vector<1x8x128xf32> to vector<8x128xf32>
    %54 = vector.shape_cast %50 : vector<8x128xf32> to vector<1x8x128xf32>
    tpu.vector_store %arg10[%51, %c0_24, %c0_25], %54 {strides = array<i32>} : memref<8x8x128xf32, #tpu.memory_space<vmem>>, vector<1x8x128xf32>,
    %c1_i32 = arith.constant 1 : i32
    %c8_i32_26 = arith.constant 8 : i32
    %55 = arith.muli %c1_i32, %c8_i32_26 : i32
    %56 = tpu.assume_multiple %55, 8 : i32
    %57 = arith.index_cast %56 : i32 to index
    %c0_27 = arith.constant 0 : index
    %58 = vector.load %arg12[%57, %c0_27] : memref<64x384xf32, #tpu.memory_space<vmem>>, vector<8x384xf32>
    %59 = arith.truncf %50 : vector<8x128xf32> to vector<8x128xbf16>
    %cst_28 = arith.constant dense<0.000000e+00> : vector<8x256xf32>
    %60 = tpu.matmul %59, %10, %cst_28 {dimension_numbers = #tpu.dot_dimension_numbers<[1], [0], [0], [1], [0, 0, 1, 1], [], []>} : vector<8x128xbf16>, vector<128x256xbf16>, vector<8x256xf32> -> vector<8x256xf32>
    %61 = arith.addf %60, %14 : vector<8x256xf32>
    %62 = vector.extract_strided_slice %58 {offsets = [0, 0], sizes = [8, 128], strides = [1, 1]} : vector<8x384xf32> to vector<8x128xf32>
    %63 = vector.extract_strided_slice %61 {offsets = [0, 0], sizes = [8, 128], strides = [1, 1]} : vector<8x256xf32> to vector<8x128xf32>
    %64 = arith.addf %62, %63 : vector<8x128xf32>
    %65 = arith.negf %64 : vector<8x128xf32>
    %66 = math.exp %65 : vector<8x128xf32>
    %cst_29 = arith.constant 1.000000e+00 : f32
    %67 = vector.broadcast %cst_29 : f32 to vector<8x128xf32>
    %68 = arith.addf %67, %66 : vector<8x128xf32>
    %69 = arith.divf %67, %68 : vector<8x128xf32>
    %70 = vector.extract_strided_slice %58 {offsets = [0, 128], sizes = [8, 128], strides = [1, 1]} : vector<8x384xf32> to vector<8x128xf32>
    %71 = vector.extract_strided_slice %61 {offsets = [0, 128], sizes = [8, 128], strides = [1, 1]} : vector<8x256xf32> to vector<8x128xf32>
    %72 = arith.addf %70, %71 : vector<8x128xf32>
    %73 = arith.negf %72 : vector<8x128xf32>
    %74 = math.exp %73 : vector<8x128xf32>
    %cst_30 = arith.constant 1.000000e+00 : f32
    %75 = vector.broadcast %cst_30 : f32 to vector<8x128xf32>
    %76 = arith.addf %75, %74 : vector<8x128xf32>
    %77 = arith.divf %75, %76 : vector<8x128xf32>
    %cst_31 = arith.constant dense<0.000000e+00> : vector<8x128xf32>
    %78 = tpu.matmul %59, %11, %cst_31 {dimension_numbers = #tpu.dot_dimension_numbers<[1], [0], [0], [1], [0, 0, 1, 1], [], []>} : vector<8x128xbf16>, vector<128x128xbf16>, vector<8x128xf32> -> vector<8x128xf32>
    %79 = arith.addf %78, %17 : vector<8x128xf32>
    %80 = vector.extract_strided_slice %58 {offsets = [0, 256], sizes = [8, 128], strides = [1, 1]} : vector<8x384xf32> to vector<8x128xf32>
    %81 = arith.mulf %69, %79 : vector<8x128xf32>
    %82 = arith.addf %80, %81 : vector<8x128xf32>
    %83 = math.tanh %82 : vector<8x128xf32>
    %84 = arith.subf %50, %83 : vector<8x128xf32>
    %85 = arith.mulf %77, %84 : vector<8x128xf32>
    %86 = arith.addf %83, %85 : vector<8x128xf32>
    %87 = arith.index_cast %c1_i32 : i32 to index
    %c0_32 = arith.constant 0 : index
    %c0_33 = arith.constant 0 : index
    %88 = vector.load %arg10[%87, %c0_32, %c0_33] : memref<8x8x128xf32, #tpu.memory_space<vmem>>, vector<1x8x128xf32>
    %89 = vector.shape_cast %88 : vector<1x8x128xf32> to vector<8x128xf32>
    %90 = vector.shape_cast %86 : vector<8x128xf32> to vector<1x8x128xf32>
    tpu.vector_store %arg10[%87, %c0_32, %c0_33], %90 {strides = array<i32>} : memref<8x8x128xf32, #tpu.memory_space<vmem>>, vector<1x8x128xf32>,
    %c2_i32 = arith.constant 2 : i32
    %c8_i32_34 = arith.constant 8 : i32
    %91 = arith.muli %c2_i32, %c8_i32_34 : i32
    %92 = tpu.assume_multiple %91, 8 : i32
    %93 = arith.index_cast %92 : i32 to index
    %c0_35 = arith.constant 0 : index
    %94 = vector.load %arg12[%93, %c0_35] : memref<64x384xf32, #tpu.memory_space<vmem>>, vector<8x384xf32>
    %95 = arith.truncf %86 : vector<8x128xf32> to vector<8x128xbf16>
    %cst_36 = arith.constant dense<0.000000e+00> : vector<8x256xf32>
    %96 = tpu.matmul %95, %10, %cst_36 {dimension_numbers = #tpu.dot_dimension_numbers<[1], [0], [0], [1], [0, 0, 1, 1], [], []>} : vector<8x128xbf16>, vector<128x256xbf16>, vector<8x256xf32> -> vector<8x256xf32>
    %97 = arith.addf %96, %14 : vector<8x256xf32>
    %98 = vector.extract_strided_slice %94 {offsets = [0, 0], sizes = [8, 128], strides = [1, 1]} : vector<8x384xf32> to vector<8x128xf32>
    %99 = vector.extract_strided_slice %97 {offsets = [0, 0], sizes = [8, 128], strides = [1, 1]} : vector<8x256xf32> to vector<8x128xf32>
    %100 = arith.addf %98, %99 : vector<8x128xf32>
    %101 = arith.negf %100 : vector<8x128xf32>
    %102 = math.exp %101 : vector<8x128xf32>
    %cst_37 = arith.constant 1.000000e+00 : f32
    %103 = vector.broadcast %cst_37 : f32 to vector<8x128xf32>
    %104 = arith.addf %103, %102 : vector<8x128xf32>
    %105 = arith.divf %103, %104 : vector<8x128xf32>
    %106 = vector.extract_strided_slice %94 {offsets = [0, 128], sizes = [8, 128], strides = [1, 1]} : vector<8x384xf32> to vector<8x128xf32>
    %107 = vector.extract_strided_slice %97 {offsets = [0, 128], sizes = [8, 128], strides = [1, 1]} : vector<8x256xf32> to vector<8x128xf32>
    %108 = arith.addf %106, %107 : vector<8x128xf32>
    %109 = arith.negf %108 : vector<8x128xf32>
    %110 = math.exp %109 : vector<8x128xf32>
    %cst_38 = arith.constant 1.000000e+00 : f32
    %111 = vector.broadcast %cst_38 : f32 to vector<8x128xf32>
    %112 = arith.addf %111, %110 : vector<8x128xf32>
    %113 = arith.divf %111, %112 : vector<8x128xf32>
    %cst_39 = arith.constant dense<0.000000e+00> : vector<8x128xf32>
    %114 = tpu.matmul %95, %11, %cst_39 {dimension_numbers = #tpu.dot_dimension_numbers<[1], [0], [0], [1], [0, 0, 1, 1], [], []>} : vector<8x128xbf16>, vector<128x128xbf16>, vector<8x128xf32> -> vector<8x128xf32>
    %115 = arith.addf %114, %17 : vector<8x128xf32>
    %116 = vector.extract_strided_slice %94 {offsets = [0, 256], sizes = [8, 128], strides = [1, 1]} : vector<8x384xf32> to vector<8x128xf32>
    %117 = arith.mulf %105, %115 : vector<8x128xf32>
    %118 = arith.addf %116, %117 : vector<8x128xf32>
    %119 = math.tanh %118 : vector<8x128xf32>
    %120 = arith.subf %86, %119 : vector<8x128xf32>
    %121 = arith.mulf %113, %120 : vector<8x128xf32>
    %122 = arith.addf %119, %121 : vector<8x128xf32>
    %123 = arith.index_cast %c2_i32 : i32 to index
    %c0_40 = arith.constant 0 : index
    %c0_41 = arith.constant 0 : index
    %124 = vector.load %arg10[%123, %c0_40, %c0_41] : memref<8x8x128xf32, #tpu.memory_space<vmem>>, vector<1x8x128xf32>
    %125 = vector.shape_cast %124 : vector<1x8x128xf32> to vector<8x128xf32>
    %126 = vector.shape_cast %122 : vector<8x128xf32> to vector<1x8x128xf32>
    tpu.vector_store %arg10[%123, %c0_40, %c0_41], %126 {strides = array<i32>} : memref<8x8x128xf32, #tpu.memory_space<vmem>>, vector<1x8x128xf32>,
    %c3_i32 = arith.constant 3 : i32
    %c8_i32_42 = arith.constant 8 : i32
    %127 = arith.muli %c3_i32, %c8_i32_42 : i32
    %128 = tpu.assume_multiple %127, 8 : i32
    %129 = arith.index_cast %128 : i32 to index
    %c0_43 = arith.constant 0 : index
    %130 = vector.load %arg12[%129, %c0_43] : memref<64x384xf32, #tpu.memory_space<vmem>>, vector<8x384xf32>
    %131 = arith.truncf %122 : vector<8x128xf32> to vector<8x128xbf16>
    %cst_44 = arith.constant dense<0.000000e+00> : vector<8x256xf32>
    %132 = tpu.matmul %131, %10, %cst_44 {dimension_numbers = #tpu.dot_dimension_numbers<[1], [0], [0], [1], [0, 0, 1, 1], [], []>} : vector<8x128xbf16>, vector<128x256xbf16>, vector<8x256xf32> -> vector<8x256xf32>
    %133 = arith.addf %132, %14 : vector<8x256xf32>
    %134 = vector.extract_strided_slice %130 {offsets = [0, 0], sizes = [8, 128], strides = [1, 1]} : vector<8x384xf32> to vector<8x128xf32>
    %135 = vector.extract_strided_slice %133 {offsets = [0, 0], sizes = [8, 128], strides = [1, 1]} : vector<8x256xf32> to vector<8x128xf32>
    %136 = arith.addf %134, %135 : vector<8x128xf32>
    %137 = arith.negf %136 : vector<8x128xf32>
    %138 = math.exp %137 : vector<8x128xf32>
    %cst_45 = arith.constant 1.000000e+00 : f32
    %139 = vector.broadcast %cst_45 : f32 to vector<8x128xf32>
    %140 = arith.addf %139, %138 : vector<8x128xf32>
    %141 = arith.divf %139, %140 : vector<8x128xf32>
    %142 = vector.extract_strided_slice %130 {offsets = [0, 128], sizes = [8, 128], strides = [1, 1]} : vector<8x384xf32> to vector<8x128xf32>
    %143 = vector.extract_strided_slice %133 {offsets = [0, 128], sizes = [8, 128], strides = [1, 1]} : vector<8x256xf32> to vector<8x128xf32>
    %144 = arith.addf %142, %143 : vector<8x128xf32>
    %145 = arith.negf %144 : vector<8x128xf32>
    %146 = math.exp %145 : vector<8x128xf32>
    %cst_46 = arith.constant 1.000000e+00 : f32
    %147 = vector.broadcast %cst_46 : f32 to vector<8x128xf32>
    %148 = arith.addf %147, %146 : vector<8x128xf32>
    %149 = arith.divf %147, %148 : vector<8x128xf32>
    %cst_47 = arith.constant dense<0.000000e+00> : vector<8x128xf32>
    %150 = tpu.matmul %131, %11, %cst_47 {dimension_numbers = #tpu.dot_dimension_numbers<[1], [0], [0], [1], [0, 0, 1, 1], [], []>} : vector<8x128xbf16>, vector<128x128xbf16>, vector<8x128xf32> -> vector<8x128xf32>
    %151 = arith.addf %150, %17 : vector<8x128xf32>
    %152 = vector.extract_strided_slice %130 {offsets = [0, 256], sizes = [8, 128], strides = [1, 1]} : vector<8x384xf32> to vector<8x128xf32>
    %153 = arith.mulf %141, %151 : vector<8x128xf32>
    %154 = arith.addf %152, %153 : vector<8x128xf32>
    %155 = math.tanh %154 : vector<8x128xf32>
    %156 = arith.subf %122, %155 : vector<8x128xf32>
    %157 = arith.mulf %149, %156 : vector<8x128xf32>
    %158 = arith.addf %155, %157 : vector<8x128xf32>
    %159 = arith.index_cast %c3_i32 : i32 to index
    %c0_48 = arith.constant 0 : index
    %c0_49 = arith.constant 0 : index
    %160 = vector.load %arg10[%159, %c0_48, %c0_49] : memref<8x8x128xf32, #tpu.memory_space<vmem>>, vector<1x8x128xf32>
    %161 = vector.shape_cast %160 : vector<1x8x128xf32> to vector<8x128xf32>
    %162 = vector.shape_cast %158 : vector<8x128xf32> to vector<1x8x128xf32>
    tpu.vector_store %arg10[%159, %c0_48, %c0_49], %162 {strides = array<i32>} : memref<8x8x128xf32, #tpu.memory_space<vmem>>, vector<1x8x128xf32>,
    %c4_i32 = arith.constant 4 : i32
    %c8_i32_50 = arith.constant 8 : i32
    %163 = arith.muli %c4_i32, %c8_i32_50 : i32
    %164 = tpu.assume_multiple %163, 8 : i32
    %165 = arith.index_cast %164 : i32 to index
    %c0_51 = arith.constant 0 : index
    %166 = vector.load %arg12[%165, %c0_51] : memref<64x384xf32, #tpu.memory_space<vmem>>, vector<8x384xf32>
    %167 = arith.truncf %158 : vector<8x128xf32> to vector<8x128xbf16>
    %cst_52 = arith.constant dense<0.000000e+00> : vector<8x256xf32>
    %168 = tpu.matmul %167, %10, %cst_52 {dimension_numbers = #tpu.dot_dimension_numbers<[1], [0], [0], [1], [0, 0, 1, 1], [], []>} : vector<8x128xbf16>, vector<128x256xbf16>, vector<8x256xf32> -> vector<8x256xf32>
    %169 = arith.addf %168, %14 : vector<8x256xf32>
    %170 = vector.extract_strided_slice %166 {offsets = [0, 0], sizes = [8, 128], strides = [1, 1]} : vector<8x384xf32> to vector<8x128xf32>
    %171 = vector.extract_strided_slice %169 {offsets = [0, 0], sizes = [8, 128], strides = [1, 1]} : vector<8x256xf32> to vector<8x128xf32>
    %172 = arith.addf %170, %171 : vector<8x128xf32>
    %173 = arith.negf %172 : vector<8x128xf32>
    %174 = math.exp %173 : vector<8x128xf32>
    %cst_53 = arith.constant 1.000000e+00 : f32
    %175 = vector.broadcast %cst_53 : f32 to vector<8x128xf32>
    %176 = arith.addf %175, %174 : vector<8x128xf32>
    %177 = arith.divf %175, %176 : vector<8x128xf32>
    %178 = vector.extract_strided_slice %166 {offsets = [0, 128], sizes = [8, 128], strides = [1, 1]} : vector<8x384xf32> to vector<8x128xf32>
    %179 = vector.extract_strided_slice %169 {offsets = [0, 128], sizes = [8, 128], strides = [1, 1]} : vector<8x256xf32> to vector<8x128xf32>
    %180 = arith.addf %178, %179 : vector<8x128xf32>
    %181 = arith.negf %180 : vector<8x128xf32>
    %182 = math.exp %181 : vector<8x128xf32>
    %cst_54 = arith.constant 1.000000e+00 : f32
    %183 = vector.broadcast %cst_54 : f32 to vector<8x128xf32>
    %184 = arith.addf %183, %182 : vector<8x128xf32>
    %185 = arith.divf %183, %184 : vector<8x128xf32>
    %cst_55 = arith.constant dense<0.000000e+00> : vector<8x128xf32>
    %186 = tpu.matmul %167, %11, %cst_55 {dimension_numbers = #tpu.dot_dimension_numbers<[1], [0], [0], [1], [0, 0, 1, 1], [], []>} : vector<8x128xbf16>, vector<128x128xbf16>, vector<8x128xf32> -> vector<8x128xf32>
    %187 = arith.addf %186, %17 : vector<8x128xf32>
    %188 = vector.extract_strided_slice %166 {offsets = [0, 256], sizes = [8, 128], strides = [1, 1]} : vector<8x384xf32> to vector<8x128xf32>
    %189 = arith.mulf %177, %187 : vector<8x128xf32>
    %190 = arith.addf %188, %189 : vector<8x128xf32>
    %191 = math.tanh %190 : vector<8x128xf32>
    %192 = arith.subf %158, %191 : vector<8x128xf32>
    %193 = arith.mulf %185, %192 : vector<8x128xf32>
    %194 = arith.addf %191, %193 : vector<8x128xf32>
    %195 = arith.index_cast %c4_i32 : i32 to index
    %c0_56 = arith.constant 0 : index
    %c0_57 = arith.constant 0 : index
    %196 = vector.load %arg10[%195, %c0_56, %c0_57] : memref<8x8x128xf32, #tpu.memory_space<vmem>>, vector<1x8x128xf32>
    %197 = vector.shape_cast %196 : vector<1x8x128xf32> to vector<8x128xf32>
    %198 = vector.shape_cast %194 : vector<8x128xf32> to vector<1x8x128xf32>
    tpu.vector_store %arg10[%195, %c0_56, %c0_57], %198 {strides = array<i32>} : memref<8x8x128xf32, #tpu.memory_space<vmem>>, vector<1x8x128xf32>,
    %c5_i32 = arith.constant 5 : i32
    %c8_i32_58 = arith.constant 8 : i32
    %199 = arith.muli %c5_i32, %c8_i32_58 : i32
    %200 = tpu.assume_multiple %199, 8 : i32
    %201 = arith.index_cast %200 : i32 to index
    %c0_59 = arith.constant 0 : index
    %202 = vector.load %arg12[%201, %c0_59] : memref<64x384xf32, #tpu.memory_space<vmem>>, vector<8x384xf32>
    %203 = arith.truncf %194 : vector<8x128xf32> to vector<8x128xbf16>
    %cst_60 = arith.constant dense<0.000000e+00> : vector<8x256xf32>
    %204 = tpu.matmul %203, %10, %cst_60 {dimension_numbers = #tpu.dot_dimension_numbers<[1], [0], [0], [1], [0, 0, 1, 1], [], []>} : vector<8x128xbf16>, vector<128x256xbf16>, vector<8x256xf32> -> vector<8x256xf32>
    %205 = arith.addf %204, %14 : vector<8x256xf32>
    %206 = vector.extract_strided_slice %202 {offsets = [0, 0], sizes = [8, 128], strides = [1, 1]} : vector<8x384xf32> to vector<8x128xf32>
    %207 = vector.extract_strided_slice %205 {offsets = [0, 0], sizes = [8, 128], strides = [1, 1]} : vector<8x256xf32> to vector<8x128xf32>
    %208 = arith.addf %206, %207 : vector<8x128xf32>
    %209 = arith.negf %208 : vector<8x128xf32>
    %210 = math.exp %209 : vector<8x128xf32>
    %cst_61 = arith.constant 1.000000e+00 : f32
    %211 = vector.broadcast %cst_61 : f32 to vector<8x128xf32>
    %212 = arith.addf %211, %210 : vector<8x128xf32>
    %213 = arith.divf %211, %212 : vector<8x128xf32>
    %214 = vector.extract_strided_slice %202 {offsets = [0, 128], sizes = [8, 128], strides = [1, 1]} : vector<8x384xf32> to vector<8x128xf32>
    %215 = vector.extract_strided_slice %205 {offsets = [0, 128], sizes = [8, 128], strides = [1, 1]} : vector<8x256xf32> to vector<8x128xf32>
    %216 = arith.addf %214, %215 : vector<8x128xf32>
    %217 = arith.negf %216 : vector<8x128xf32>
    %218 = math.exp %217 : vector<8x128xf32>
    %cst_62 = arith.constant 1.000000e+00 : f32
    %219 = vector.broadcast %cst_62 : f32 to vector<8x128xf32>
    %220 = arith.addf %219, %218 : vector<8x128xf32>
    %221 = arith.divf %219, %220 : vector<8x128xf32>
    %cst_63 = arith.constant dense<0.000000e+00> : vector<8x128xf32>
    %222 = tpu.matmul %203, %11, %cst_63 {dimension_numbers = #tpu.dot_dimension_numbers<[1], [0], [0], [1], [0, 0, 1, 1], [], []>} : vector<8x128xbf16>, vector<128x128xbf16>, vector<8x128xf32> -> vector<8x128xf32>
    %223 = arith.addf %222, %17 : vector<8x128xf32>
    %224 = vector.extract_strided_slice %202 {offsets = [0, 256], sizes = [8, 128], strides = [1, 1]} : vector<8x384xf32> to vector<8x128xf32>
    %225 = arith.mulf %213, %223 : vector<8x128xf32>
    %226 = arith.addf %224, %225 : vector<8x128xf32>
    %227 = math.tanh %226 : vector<8x128xf32>
    %228 = arith.subf %194, %227 : vector<8x128xf32>
    %229 = arith.mulf %221, %228 : vector<8x128xf32>
    %230 = arith.addf %227, %229 : vector<8x128xf32>
    %231 = arith.index_cast %c5_i32 : i32 to index
    %c0_64 = arith.constant 0 : index
    %c0_65 = arith.constant 0 : index
    %232 = vector.load %arg10[%231, %c0_64, %c0_65] : memref<8x8x128xf32, #tpu.memory_space<vmem>>, vector<1x8x128xf32>
    %233 = vector.shape_cast %232 : vector<1x8x128xf32> to vector<8x128xf32>
    %234 = vector.shape_cast %230 : vector<8x128xf32> to vector<1x8x128xf32>
    tpu.vector_store %arg10[%231, %c0_64, %c0_65], %234 {strides = array<i32>} : memref<8x8x128xf32, #tpu.memory_space<vmem>>, vector<1x8x128xf32>,
    %c6_i32 = arith.constant 6 : i32
    %c8_i32_66 = arith.constant 8 : i32
    %235 = arith.muli %c6_i32, %c8_i32_66 : i32
    %236 = tpu.assume_multiple %235, 8 : i32
    %237 = arith.index_cast %236 : i32 to index
    %c0_67 = arith.constant 0 : index
    %238 = vector.load %arg12[%237, %c0_67] : memref<64x384xf32, #tpu.memory_space<vmem>>, vector<8x384xf32>
    %239 = arith.truncf %230 : vector<8x128xf32> to vector<8x128xbf16>
    %cst_68 = arith.constant dense<0.000000e+00> : vector<8x256xf32>
    %240 = tpu.matmul %239, %10, %cst_68 {dimension_numbers = #tpu.dot_dimension_numbers<[1], [0], [0], [1], [0, 0, 1, 1], [], []>} : vector<8x128xbf16>, vector<128x256xbf16>, vector<8x256xf32> -> vector<8x256xf32>
    %241 = arith.addf %240, %14 : vector<8x256xf32>
    %242 = vector.extract_strided_slice %238 {offsets = [0, 0], sizes = [8, 128], strides = [1, 1]} : vector<8x384xf32> to vector<8x128xf32>
    %243 = vector.extract_strided_slice %241 {offsets = [0, 0], sizes = [8, 128], strides = [1, 1]} : vector<8x256xf32> to vector<8x128xf32>
    %244 = arith.addf %242, %243 : vector<8x128xf32>
    %245 = arith.negf %244 : vector<8x128xf32>
    %246 = math.exp %245 : vector<8x128xf32>
    %cst_69 = arith.constant 1.000000e+00 : f32
    %247 = vector.broadcast %cst_69 : f32 to vector<8x128xf32>
    %248 = arith.addf %247, %246 : vector<8x128xf32>
    %249 = arith.divf %247, %248 : vector<8x128xf32>
    %250 = vector.extract_strided_slice %238 {offsets = [0, 128], sizes = [8, 128], strides = [1, 1]} : vector<8x384xf32> to vector<8x128xf32>
    %251 = vector.extract_strided_slice %241 {offsets = [0, 128], sizes = [8, 128], strides = [1, 1]} : vector<8x256xf32> to vector<8x128xf32>
    %252 = arith.addf %250, %251 : vector<8x128xf32>
    %253 = arith.negf %252 : vector<8x128xf32>
    %254 = math.exp %253 : vector<8x128xf32>
    %cst_70 = arith.constant 1.000000e+00 : f32
    %255 = vector.broadcast %cst_70 : f32 to vector<8x128xf32>
    %256 = arith.addf %255, %254 : vector<8x128xf32>
    %257 = arith.divf %255, %256 : vector<8x128xf32>
    %cst_71 = arith.constant dense<0.000000e+00> : vector<8x128xf32>
    %258 = tpu.matmul %239, %11, %cst_71 {dimension_numbers = #tpu.dot_dimension_numbers<[1], [0], [0], [1], [0, 0, 1, 1], [], []>} : vector<8x128xbf16>, vector<128x128xbf16>, vector<8x128xf32> -> vector<8x128xf32>
    %259 = arith.addf %258, %17 : vector<8x128xf32>
    %260 = vector.extract_strided_slice %238 {offsets = [0, 256], sizes = [8, 128], strides = [1, 1]} : vector<8x384xf32> to vector<8x128xf32>
    %261 = arith.mulf %249, %259 : vector<8x128xf32>
    %262 = arith.addf %260, %261 : vector<8x128xf32>
    %263 = math.tanh %262 : vector<8x128xf32>
    %264 = arith.subf %230, %263 : vector<8x128xf32>
    %265 = arith.mulf %257, %264 : vector<8x128xf32>
    %266 = arith.addf %263, %265 : vector<8x128xf32>
    %267 = arith.index_cast %c6_i32 : i32 to index
    %c0_72 = arith.constant 0 : index
    %c0_73 = arith.constant 0 : index
    %268 = vector.load %arg10[%267, %c0_72, %c0_73] : memref<8x8x128xf32, #tpu.memory_space<vmem>>, vector<1x8x128xf32>
    %269 = vector.shape_cast %268 : vector<1x8x128xf32> to vector<8x128xf32>
    %270 = vector.shape_cast %266 : vector<8x128xf32> to vector<1x8x128xf32>
    tpu.vector_store %arg10[%267, %c0_72, %c0_73], %270 {strides = array<i32>} : memref<8x8x128xf32, #tpu.memory_space<vmem>>, vector<1x8x128xf32>,
    %c7_i32 = arith.constant 7 : i32
    %c8_i32_74 = arith.constant 8 : i32
    %271 = arith.muli %c7_i32, %c8_i32_74 : i32
    %272 = tpu.assume_multiple %271, 8 : i32
    %273 = arith.index_cast %272 : i32 to index
    %c0_75 = arith.constant 0 : index
    %274 = vector.load %arg12[%273, %c0_75] : memref<64x384xf32, #tpu.memory_space<vmem>>, vector<8x384xf32>
    %275 = arith.truncf %266 : vector<8x128xf32> to vector<8x128xbf16>
    %cst_76 = arith.constant dense<0.000000e+00> : vector<8x256xf32>
    %276 = tpu.matmul %275, %10, %cst_76 {dimension_numbers = #tpu.dot_dimension_numbers<[1], [0], [0], [1], [0, 0, 1, 1], [], []>} : vector<8x128xbf16>, vector<128x256xbf16>, vector<8x256xf32> -> vector<8x256xf32>
    %277 = arith.addf %276, %14 : vector<8x256xf32>
    %278 = vector.extract_strided_slice %274 {offsets = [0, 0], sizes = [8, 128], strides = [1, 1]} : vector<8x384xf32> to vector<8x128xf32>
    %279 = vector.extract_strided_slice %277 {offsets = [0, 0], sizes = [8, 128], strides = [1, 1]} : vector<8x256xf32> to vector<8x128xf32>
    %280 = arith.addf %278, %279 : vector<8x128xf32>
    %281 = arith.negf %280 : vector<8x128xf32>
    %282 = math.exp %281 : vector<8x128xf32>
    %cst_77 = arith.constant 1.000000e+00 : f32
    %283 = vector.broadcast %cst_77 : f32 to vector<8x128xf32>
    %284 = arith.addf %283, %282 : vector<8x128xf32>
    %285 = arith.divf %283, %284 : vector<8x128xf32>
    %286 = vector.extract_strided_slice %274 {offsets = [0, 128], sizes = [8, 128], strides = [1, 1]} : vector<8x384xf32> to vector<8x128xf32>
    %287 = vector.extract_strided_slice %277 {offsets = [0, 128], sizes = [8, 128], strides = [1, 1]} : vector<8x256xf32> to vector<8x128xf32>
    %288 = arith.addf %286, %287 : vector<8x128xf32>
    %289 = arith.negf %288 : vector<8x128xf32>
    %290 = math.exp %289 : vector<8x128xf32>
    %cst_78 = arith.constant 1.000000e+00 : f32
    %291 = vector.broadcast %cst_78 : f32 to vector<8x128xf32>
    %292 = arith.addf %291, %290 : vector<8x128xf32>
    %293 = arith.divf %291, %292 : vector<8x128xf32>
    %cst_79 = arith.constant dense<0.000000e+00> : vector<8x128xf32>
    %294 = tpu.matmul %275, %11, %cst_79 {dimension_numbers = #tpu.dot_dimension_numbers<[1], [0], [0], [1], [0, 0, 1, 1], [], []>} : vector<8x128xbf16>, vector<128x128xbf16>, vector<8x128xf32> -> vector<8x128xf32>
    %295 = arith.addf %294, %17 : vector<8x128xf32>
    %296 = vector.extract_strided_slice %274 {offsets = [0, 256], sizes = [8, 128], strides = [1, 1]} : vector<8x384xf32> to vector<8x128xf32>
    %297 = arith.mulf %285, %295 : vector<8x128xf32>
    %298 = arith.addf %296, %297 : vector<8x128xf32>
    %299 = math.tanh %298 : vector<8x128xf32>
    %300 = arith.subf %266, %299 : vector<8x128xf32>
    %301 = arith.mulf %293, %300 : vector<8x128xf32>
    %302 = arith.addf %299, %301 : vector<8x128xf32>
    %303 = arith.index_cast %c7_i32 : i32 to index
    %c0_80 = arith.constant 0 : index
    %c0_81 = arith.constant 0 : index
    %304 = vector.load %arg10[%303, %c0_80, %c0_81] : memref<8x8x128xf32, #tpu.memory_space<vmem>>, vector<1x8x128xf32>
    %305 = vector.shape_cast %304 : vector<1x8x128xf32> to vector<8x128xf32>
    %306 = vector.shape_cast %302 : vector<8x128xf32> to vector<1x8x128xf32>
    tpu.vector_store %arg10[%303, %c0_80, %c0_81], %306 {strides = array<i32>} : memref<8x8x128xf32, #tpu.memory_space<vmem>>, vector<1x8x128xf32>,
    %c8_i32_82 = arith.constant 8 : i32
    %c0_83 = arith.constant 0 : index
    %c0_84 = arith.constant 0 : index
    %307 = vector.load %arg11[%c0_83, %c0_84] : memref<8x128xf32, #tpu.memory_space<vmem>>, vector<8x128xf32>
    tpu.vector_store %arg11[%c0_83, %c0_84], %302 {strides = array<i32>} : memref<8x128xf32, #tpu.memory_space<vmem>>, vector<8x128xf32>,
    return
  }
  func.func @transform_0(%arg0: i32, %arg1: i32) -> (i32, i32) {
    %c1_i32 = arith.constant 1 : i32
    %0 = arith.muli %arg0, %c1_i32 : i32
    %1 = arith.addi %0, %arg1 : i32
    %c0_i32 = arith.constant 0 : i32
    %c0_i32_0 = arith.constant 0 : i32
    return %1, %c0_i32 : i32, i32
  }
  func.func @transform_1(%arg0: i32, %arg1: i32) -> (i32, i32) {
    %c0_i32 = arith.constant 0 : i32
    %c0_i32_0 = arith.constant 0 : i32
    %c0_i32_1 = arith.constant 0 : i32
    return %c0_i32, %c0_i32_0 : i32, i32
  }
  func.func @transform_2(%arg0: i32, %arg1: i32) -> (i32, i32) {
    %c0_i32 = arith.constant 0 : i32
    %c0_i32_0 = arith.constant 0 : i32
    %c0_i32_1 = arith.constant 0 : i32
    return %c0_i32, %c0_i32_0 : i32, i32
  }
  func.func @transform_3(%arg0: i32, %arg1: i32) -> (i32, i32) {
    %c0_i32 = arith.constant 0 : i32
    %c0_i32_0 = arith.constant 0 : i32
    %c0_i32_1 = arith.constant 0 : i32
    return %c0_i32, %c0_i32_0 : i32, i32
  }
  func.func @transform_4(%arg0: i32, %arg1: i32) -> (i32, i32) {
    %c0_i32 = arith.constant 0 : i32
    %c0_i32_0 = arith.constant 0 : i32
    %c0_i32_1 = arith.constant 0 : i32
    return %c0_i32, %c0_i32_0 : i32, i32
  }
  func.func @transform_5(%arg0: i32, %arg1: i32) -> (i32, i32) {
    %c0_i32 = arith.constant 0 : i32
    %c0_i32_0 = arith.constant 0 : i32
    %c0_i32_1 = arith.constant 0 : i32
    return %c0_i32, %c0_i32_0 : i32, i32
  }
  func.func @transform_6(%arg0: i32, %arg1: i32) -> (i32, i32) {
    %c0_i32 = arith.constant 0 : i32
    %c0_i32_0 = arith.constant 0 : i32
    %c0_i32_1 = arith.constant 0 : i32
    return %c0_i32, %c0_i32_0 : i32, i32
  }
  func.func @transform_7(%arg0: i32, %arg1: i32) -> (i32, i32) {
    %c0_i32 = arith.constant 0 : i32
    %c0_i32_0 = arith.constant 0 : i32
    return %arg0, %c0_i32 : i32, i32
  }
  func.func @transform_8(%arg0: i32, %arg1: i32) -> (i32, i32, i32) {
    %c0_i32 = arith.constant 0 : i32
    %c0_i32_0 = arith.constant 0 : i32
    return %arg1, %arg0, %c0_i32 : i32, i32, i32
  }
}

</mosaic_0001>

<llo_original>
// kernel: tpu_custom_call.1
$region0: #{tpu_custom_call.1}
  #allocation0 [shape = 'u32[]', space=smem, size = 0x4, offset = 0x4, fixed_abs, tag = 'smem constant byte address 0x4 - core index']
  #allocation1 [shape = 'u32[144,128]{1,0:T(1,128)}', space=vmem, size = 0x12000, scoped, tag = 'internal scratch']
  #allocation2 [shape = 'f32[8,128]{1,0:T(8,128)}', space=vmem, size = 0x1000, scoped, tag = 'scratch operand']
  #allocation3 [shape = 'f32[64,384]{1,0:T(8,128)}', space=vmem, size = 0x18000, scoped, tag = 'scratch operand']
  %s0 = inlined_call_operand.vmem [shape: bf16[64,16], index: 0, kind: input, shape index: {}]
  %s1 = inlined_call_operand.vmem [shape: bf16[16,384], index: 1, kind: input, shape index: {}]
  %s2 = inlined_call_operand.hbm [shape: bf16[128,256], index: 2, kind: input, shape index: {}]
  %s3 = inlined_call_operand.hbm [shape: bf16[128,128], index: 3, kind: input, shape index: {}]
  %s4 = inlined_call_operand.vmem [shape: f32[1,384], index: 4, kind: input, shape index: {}]
  %s5 = inlined_call_operand.vmem [shape: f32[1,256], index: 5, kind: input, shape index: {}]
  %s6 = inlined_call_operand.vmem [shape: f32[1,128], index: 6, kind: input, shape index: {}]
  %s7 = inlined_call_operand.vmem [shape: f32[8,128], index: 7, kind: input, shape index: {}]
  %s8 = inlined_call_operand.hbm [shape: f32[8,8,128], index: 8, kind: output, shape index: {}]
  %s9 = sld [smem:[#allocation0]]
  $region54: #{tpu_custom_call.1} parent=0
    _
  %s11 = ssub.s32 1, %s9
  %s12 = scalar_select 0, %s11, %s9
  $region1: #{tpu_custom_call.1} parent=0
    #allocation4 [shape = 'u8[65536]{0}', space=vmem, size = 0x10000, scoped, tag = 'input window, operand 2, single buffered']
    #allocation5 [shape = 's32[1]{0}', space=sflag, size = 0x4, scoped, tag = 'scoped memory for tpu_custom_call.1']
    #allocation6 [shape = 's32[1]{0}', space=sflag, size = 0x4, scoped, tag = 'scoped memory for tpu_custom_call.1']
    #allocation7 [shape = 'u8[32768]{0}', space=vmem, size = 0x8000, scoped, tag = 'input window, operand 3, single buffered']
    #allocation8 [shape = 's32[1]{0}', space=sflag, size = 0x4, scoped, tag = 'scoped memory for tpu_custom_call.1']
    #allocation9 [shape = 'u8[32768]{0}', space=vmem, size = 0x8000, scoped, tag = 'output window, operand 0, single buffered']
    %13 = vsyncpa [#allocation5], 0
    %14 = vsyncpa [#allocation8], 0
    %15 = vsyncpa [#allocation6], 0
    // Predicated region
    $region2: #{tpu_custom_call.1} parent=1 // pred_check
      _
    $region3: #{tpu_custom_call.1} parent=1 // pred_check_branch
      %17 = sbr.rel (0) target = $region5
    $region4: #{tpu_custom_call.1} parent=1 // pred_region
      %s18 = sadd.s32 0, 0
      %s19 = smul.u32 8, %s18
      %p20 = scmp.lt.s32.totalorder %s19, 7
      %s21 = scalar_select %p20, %s19, 7
      %s22 = smul.addr %s21, 4
      %s23 = scalar_lea.vmem %s0, %s22
      %s24 = sadd.s32 0, 0
      %s25 = smul.u32 8, %s24
    $region5: #{tpu_custom_call.1} parent=1 // pred_fallthru
      _
    // Predicated region
    $region6: #{tpu_custom_call.1} parent=1 // pred_check
      _
    $region7: #{tpu_custom_call.1} parent=1 // pred_check_branch
      %27 = sbr.rel (0) target = $region9
    $region8: #{tpu_custom_call.1} parent=1 // pred_region
      _
    $region9: #{tpu_custom_call.1} parent=1 // pred_fallthru
      _
    // Predicated region
    $region10: #{tpu_custom_call.1} parent=1 // pred_check
      _
    $region11: #{tpu_custom_call.1} parent=1 // pred_check_branch
      %29 = sbr.rel (0) target = $region13
    $region12: #{tpu_custom_call.1} parent=1 // pred_region
      %s31 = ssub.s32 2048, 2048
      %32 = vsyncadd [#allocation5], %s31
      %s33 = sshll.u32 [#allocation4], 4
      %s34 = int_to_ptr.vmem [resolvable:$true] %s33
      %39 = dma.hbm_to_vmem [thread:$0]  %s2, 2048, %s34, [#allocation5], 128, 128, 8
    $region13: #{tpu_custom_call.1} parent=1 // pred_fallthru
      _
    // Predicated region
    $region14: #{tpu_custom_call.1} parent=1 // pred_check
      _
    $region15: #{tpu_custom_call.1} parent=1 // pred_check_branch
      %41 = sbr.rel (0) target = $region17
    $region16: #{tpu_custom_call.1} parent=1 // pred_region
      %s43 = ssub.s32 1024, 1024
      %44 = vsyncadd [#allocation8], %s43
      %s45 = sshll.u32 [#allocation7], 4
      %s46 = int_to_ptr.vmem [resolvable:$true] %s45
      %51 = dma.hbm_to_vmem [thread:$0]  %s3, 1024, %s46, [#allocation8], 64, 64, 4
    $region17: #{tpu_custom_call.1} parent=1 // pred_fallthru
      _
    // Predicated region
    $region18: #{tpu_custom_call.1} parent=1 // pred_check
      _
    $region19: #{tpu_custom_call.1} parent=1 // pred_check_branch
      %53 = sbr.rel (0) target = $region21
    $region20: #{tpu_custom_call.1} parent=1 // pred_region
      _
    $region21: #{tpu_custom_call.1} parent=1 // pred_fallthru
      _
    // Predicated region
    $region22: #{tpu_custom_call.1} parent=1 // pred_check
      _
    $region23: #{tpu_custom_call.1} parent=1 // pred_check_branch
      %55 = sbr.rel (0) target = $region25
    $region24: #{tpu_custom_call.1} parent=1 // pred_region
      _
    $region25: #{tpu_custom_call.1} parent=1 // pred_fallthru
      _
    // Predicated region
    $region26: #{tpu_custom_call.1} parent=1 // pred_check
      _
    $region27: #{tpu_custom_call.1} parent=1 // pred_check_branch
      %57 = sbr.rel (0) target = $region29
    $region28: #{tpu_custom_call.1} parent=1 // pred_region
      _
    $region29: #{tpu_custom_call.1} parent=1 // pred_fallthru
      _
    // Predicated region
    $region30: #{tpu_custom_call.1} parent=1 // pred_check
      _
    $region31: #{tpu_custom_call.1} parent=1 // pred_check_branch
      %59 = sbr.rel (0) target = $region33
    $region32: #{tpu_custom_call.1} parent=1 // pred_region
      _
    $region33: #{tpu_custom_call.1} parent=1 // pred_fallthru
      _
    // Predicated region
    $region34: #{tpu_custom_call.1} parent=1 // pred_check
      _
    $region35: #{tpu_custom_call.1} parent=1 // pred_check_branch
      %61 = sbr.rel (0) target = $region37
    $region36: #{tpu_custom_call.1} parent=1 // pred_region
      %62 = dma.done [#allocation5], 2048
    $region37: #{tpu_custom_call.1} parent=1 // pred_fallthru
      _
    // Predicated region
    $region38: #{tpu_custom_call.1} parent=1 // pred_check
      _
    $region39: #{tpu_custom_call.1} parent=1 // pred_check_branch
      %64 = sbr.rel (0) target = $region41
    $region40: #{tpu_custom_call.1} parent=1 // pred_region
      %65 = dma.done [#allocation8], 1024
    $region41: #{tpu_custom_call.1} parent=1 // pred_fallthru
      _
    %s66 = sadd.s32 0, 0
    %s67 = smul.u32 8, %s66
    %p68 = scmp.lt.s32.totalorder %s67, 7
    %s69 = scalar_select %p68, %s67, 7
    %s70 = smul.addr %s69, 4
    %s71 = scalar_lea.vmem %s0, %s70
    %s72 = sadd.s32 0, 0
    %s73 = smul.u32 8, %s72
    %p74 = scmp.lt.s32.totalorder %s73, 7
    %s75 = scalar_select %p74, %s73, 7
    %s76 = smul.addr %s75, 4
    %s77 = scalar_lea.vmem %s0, %s76
    %s78 = sadd.s32 0, 0
    %s79 = smul.u32 8, %s78
    %p81 = scmp.eq.s32.totalorder 0, 0
    // Predicated region
    $region42: #{tpu_custom_call.1} parent=1 // pred_check
      %p82 = pneg %p81
    $region43: #{tpu_custom_call.1} parent=1 // pred_check_branch
      %84 = sbr.rel (%p82) target = $region45
    $region44: #{tpu_custom_call.1} parent=1 // pred_region
      %v85 = vld [vmem:[%s7] sm:$0xff]
      %86 = vst [vmem:[#allocation2] sm:$0xff] %v85
    $region45: #{tpu_custom_call.1} parent=1 // pred_fallthru
      _
    %v87 = vld [vmem:[%s77] sm:$0xf]
    %v88 = vld [vmem:[%s77 + $0x4] sm:$0xf]
    %v89 = vld [vmem:[%s77 + $0x8] sm:$0xf]
    %v90 = vld [vmem:[%s77 + $0xc] sm:$0xf]
    %v91 = vld [vmem:[%s77 + $0x10] sm:$0xf]
    %v92 = vld [vmem:[%s77 + $0x14] sm:$0xf]
    %v93 = vld [vmem:[%s77 + $0x18] sm:$0xf]
    %v94 = vld [vmem:[%s77 + $0x1c] sm:$0xf]
    %v95 = vld [vmem:[%s1] sm:$0xff]
    %v96 = vld [vmem:[%s1 + $0x8] sm:$0xf]
    %v97 = vld [vmem:[%s1 + $0xc] sm:$0xff]
    %v98 = vld [vmem:[%s1 + $0x14] sm:$0xf]
    %v99 = vld [vmem:[%s4] sm:$0x7]
    %v101 = vlaneseq
    %v102 = vshrl.u32 %v101, 7
    %v103 = vsub.s32 0, %v102
    %v104 = vrot.slane %v99, %v103
    %v105 = vlaneseq
    %v106 = vshrl.u32 %v105, 7
    %v107 = vsub.s32 1, %v106
    %v108 = vrot.slane %v99, %v107
    %v109 = vlaneseq
    %v110 = vshrl.u32 %v109, 7
    %v111 = vsub.s32 2, %v110
    %v112 = vrot.slane %v99, %v111
    %v124 = vunpack.c.l.b16 %v87
    %v125 = vunpack.c.l.b16 %v88
    %v126 = vunpack.c.l.b16 %v89
    %v127 = vunpack.c.l.b16 %v90
    %v128 = vunpack.c.l.b16 %v91
    %v129 = vunpack.c.l.b16 %v92
    %v130 = vunpack.c.l.b16 %v93
    %v131 = vunpack.c.l.b16 %v94
    %v132 = vpack.c.b16 %v125, %v124
    %v133 = vpack.c.b16 %v127, %v126
    %v134 = vpack.c.b16 %v129, %v128
    %v135 = vpack.c.b16 %v131, %v130
    %v140 = vunpack.c.l.b16 %v95
    %v141 = vunpack.c.h.b16 %v95
    %v142 = vunpack.c.l.b16 %v96
    %v143 = vunpack.c.l.b16 %v97
    %v144 = vunpack.c.h.b16 %v97
    %v145 = vunpack.c.l.b16 %v98
    %v146 = vpack.c.b16 %v143, %v140
    %v147 = vpack.c.b16 %v144, %v141
    %v148 = vpack.c.b16 %v145, %v142
    %vm152 = vcmask 130048
    %v154 = vsel %vm152, %v132, 0
    %v157 = vsel %vm152, %v133, 0
    %v160 = vsel %vm152, %v134, 0
    %v163 = vsel %vm152, %v135, 0
    %165 = vmatprep.subr.bf16.mxu0 0
    %166 = vmatpush1.bf16.msra.mxu0 0
    %167 = vmatprep.subr.bf16.mxu0 0
    %168 = vmatpush1.bf16.msra.mxu0 0
    %169 = vmatprep.subr.bf16.mxu0 0
    %170 = vmatpush1.bf16.msra.mxu0 0
    %171 = vmatprep.subr.bf16.mxu0 0
    %172 = vmatpush1.bf16.msra.mxu0 0
    %173 = vmatprep.subr.bf16.mxu0 0
    %174 = vmatpush1.bf16.msra.mxu0 0
    %175 = vmatprep.subr.bf16.mxu0 0
    %176 = vmatpush1.bf16.msra.mxu0 0
    %177 = vmatprep.subr.bf16.mxu0 0
    %178 = vmatpush1.bf16.msra.mxu0 0
    %179 = vmatprep.subr.bf16.mxu0 %v147
    %180 = vmatpush1.bf16.msra.mxu0 %v146
    %181 = vmatprep.subr.bf16.mxu0 0
    %182 = vmatpush2.bf16.msra.mxu0 0
    %183 = vmatprep.subr.bf16.mxu0 0
    %184 = vmatpush2.bf16.msra.mxu0 0
    %185 = vmatprep.subr.bf16.mxu0 0
    %186 = vmatpush2.bf16.msra.mxu0 0
    %187 = vmatprep.subr.bf16.mxu0 0
    %188 = vmatpush2.bf16.msra.mxu0 0
    %189 = vmatprep.subr.bf16.mxu0 0
    %190 = vmatpush2.bf16.msra.mxu0 0
    %191 = vmatprep.subr.bf16.mxu0 0
    %192 = vmatpush2.bf16.msra.mxu0 0
    %193 = vmatprep.subr.bf16.mxu0 0
    %194 = vmatpush2.bf16.msra.mxu0 0
    %195 = vmatprep.subr.bf16.mxu0 0
    %196 = vmatpush2.bf16.msra.mxu0 0
    %197 = vmatprep.mubr.bf16.mxu0 0
    %198 = vmatmul.mubr.bf16.gmra.mxu0 %v154
    %v199 = vpop.f32.mrf.mxu0
    %v200 = vadd.f32 %v104, %v199
    %v201 = vpop.f32.mrf.mxu0
    %v202 = vadd.f32 %v108, %v201
    %v203 = vpop.f32.mrf.mxu0
    %v204 = vadd.f32 %v104, %v203
    %v205 = vpop.f32.mrf.mxu0
    %v206 = vadd.f32 %v108, %v205
    %207 = vmatprep.mubr.bf16.mxu0 0
    %208 = vmatmul.mubr.bf16.gmra.mxu0 %v157
    %v209 = vpop.f32.mrf.mxu0
    %v210 = vadd.f32 %v104, %v209
    %v211 = vpop.f32.mrf.mxu0
    %v212 = vadd.f32 %v108, %v211
    %v213 = vpop.f32.mrf.mxu0
    %v214 = vadd.f32 %v104, %v213
    %v215 = vpop.f32.mrf.mxu0
    %v216 = vadd.f32 %v108, %v215
    %217 = vmatprep.mubr.bf16.mxu0 0
    %218 = vmatmul.mubr.bf16.gmra.mxu0 %v160
    %v219 = vpop.f32.mrf.mxu0
    %v220 = vadd.f32 %v104, %v219
    %v221 = vpop.f32.mrf.mxu0
    %v222 = vadd.f32 %v108, %v221
    %v223 = vpop.f32.mrf.mxu0
    %v224 = vadd.f32 %v104, %v223
    %v225 = vpop.f32.mrf.mxu0
    %v226 = vadd.f32 %v108, %v225
    %227 = vmatprep.mubr.bf16.mxu0 0
    %228 = vmatmul.mubr.bf16.gmra.mxu0 %v163
    %v229 = vpop.f32.mrf.mxu0
    %v230 = vadd.f32 %v104, %v229
    %v231 = vpop.f32.mrf.mxu0
    %v232 = vadd.f32 %v108, %v231
    %v233 = vpop.f32.mrf.mxu0
    %v234 = vadd.f32 %v104, %v233
    %v235 = vpop.f32.mrf.mxu0
    %v236 = vadd.f32 %v108, %v235
    %237 = vdwg.mxu0
    %238 = vmatprep.subr.bf16.mxu0 0
    %239 = vmatpush1.bf16.msra.mxu0 0
    %240 = vmatprep.subr.bf16.mxu0 0
    %241 = vmatpush1.bf16.msra.mxu0 0
    %242 = vmatprep.subr.bf16.mxu0 0
    %243 = vmatpush1.bf16.msra.mxu0 0
    %244 = vmatprep.subr.bf16.mxu0 0
    %245 = vmatpush1.bf16.msra.mxu0 0
    %246 = vmatprep.subr.bf16.mxu0 0
    %247 = vmatpush1.bf16.msra.mxu0 0
    %248 = vmatprep.subr.bf16.mxu0 0
    %249 = vmatpush1.bf16.msra.mxu0 0
    %250 = vmatprep.subr.bf16.mxu0 0
    %251 = vmatpush1.bf16.msra.mxu0 0
    %252 = vmatprep.subr.bf16.mxu0 0
    %253 = vmatpush1.bf16.msra.mxu0 %v148
    %254 = vmatprep.subr.bf16.mxu0 0
    %255 = vmatpush2.bf16.msra.mxu0 0
    %256 = vmatprep.subr.bf16.mxu0 0
    %257 = vmatpush2.bf16.msra.mxu0 0
    %258 = vmatprep.subr.bf16.mxu0 0
    %259 = vmatpush2.bf16.msra.mxu0 0
    %260 = vmatprep.subr.bf16.mxu0 0
    %261 = vmatpush2.bf16.msra.mxu0 0
    %262 = vmatprep.subr.bf16.mxu0 0
    %263 = vmatpush2.bf16.msra.mxu0 0
    %264 = vmatprep.subr.bf16.mxu0 0
    %265 = vmatpush2.bf16.msra.mxu0 0
    %266 = vmatprep.subr.bf16.mxu0 0
    %267 = vmatpush2.bf16.msra.mxu0 0
    %268 = vmatprep.subr.bf16.mxu0 0
    %269 = vmatpush2.bf16.msra.mxu0 0
    %270 = vmatprep.mubr.bf16.mxu0 0
    %271 = vmatmul.mubr.bf16.gmra.mxu0 %v154
    %v272 = vpop.f32.mrf.mxu0
    %v273 = vadd.f32 %v112, %v272
    %v274 = vpop.f32.mrf.mxu0
    %v275 = vpop.f32.mrf.mxu0
    %v276 = vadd.f32 %v112, %v275
    %v277 = vpop.f32.mrf.mxu0
    %278 = vmatprep.mubr.bf16.mxu0 0
    %279 = vmatmul.mubr.bf16.gmra.mxu0 %v157
    %v280 = vpop.f32.mrf.mxu0
    %v281 = vadd.f32 %v112, %v280
    %v282 = vpop.f32.mrf.mxu0
    %v283 = vpop.f32.mrf.mxu0
    %v284 = vadd.f32 %v112, %v283
    %v285 = vpop.f32.mrf.mxu0
    %286 = vmatprep.mubr.bf16.mxu0 0
    %287 = vmatmul.mubr.bf16.gmra.mxu0 %v160
    %v288 = vpop.f32.mrf.mxu0
    %v289 = vadd.f32 %v112, %v288
    %v290 = vpop.f32.mrf.mxu0
    %v291 = vpop.f32.mrf.mxu0
    %v292 = vadd.f32 %v112, %v291
    %v293 = vpop.f32.mrf.mxu0
    %294 = vmatprep.mubr.bf16.mxu0 0
    %295 = vmatmul.mubr.bf16.gmra.mxu0 %v163
    %v296 = vpop.f32.mrf.mxu0
    %v297 = vadd.f32 %v112, %v296
    %v298 = vpop.f32.mrf.mxu0
    %v299 = vpop.f32.mrf.mxu0
    %v300 = vadd.f32 %v112, %v299
    %v301 = vpop.f32.mrf.mxu0
    %302 = vdwg.mxu0
    %303 = vst [vmem:[#allocation3] sm:$0xff] %v200
    %304 = vst [vmem:[#allocation3 + $0x8] sm:$0xff] %v202
    %305 = vst [vmem:[#allocation3 + $0x10] sm:$0xff] %v273
    %306 = vst [vmem:[#allocation3 + $0x18] sm:$0xff] %v204
    %307 = vst [vmem:[#allocation3 + $0x20] sm:$0xff] %v206
    %308 = vst [vmem:[#allocation3 + $0x28] sm:$0xff] %v276
    %309 = vst [vmem:[#allocation3 + $0x30] sm:$0xff] %v210
    %310 = vst [vmem:[#allocation3 + $0x38] sm:$0xff] %v212
    %311 = vst [vmem:[#allocation3 + $0x40] sm:$0xff] %v281
    %312 = vst [vmem:[#allocation3 + $0x48] sm:$0xff] %v214
    %313 = vst [vmem:[#allocation3 + $0x50] sm:$0xff] %v216
    %314 = vst [vmem:[#allocation3 + $0x58] sm:$0xff] %v284
    %315 = vst [vmem:[#allocation3 + $0x60] sm:$0xff] %v220
    %316 = vst [vmem:[#allocation3 + $0x68] sm:$0xff] %v222
    %317 = vst [vmem:[#allocation3 + $0x70] sm:$0xff] %v289
    %318 = vst [vmem:[#allocation3 + $0x78] sm:$0xff] %v224
    %319 = vst [vmem:[#allocation3 + $0x80] sm:$0xff] %v226
    %320 = vst [vmem:[#allocation3 + $0x88] sm:$0xff] %v292
    %321 = vst [vmem:[#allocation3 + $0x90] sm:$0xff] %v230
    %322 = vst [vmem:[#allocation3 + $0x98] sm:$0xff] %v232
    %323 = vst [vmem:[#allocation3 + $0xa0] sm:$0xff] %v297
    %324 = vst [vmem:[#allocation3 + $0xa8] sm:$0xff] %v234
    %325 = vst [vmem:[#allocation3 + $0xb0] sm:$0xff] %v236
    %326 = vst [vmem:[#allocation3 + $0xb8] sm:$0xff] %v300
    %v327 = vld [vmem:[#allocation4] sm:$0xff]
    %v328 = vld [vmem:[#allocation4 + $0x8] sm:$0xff]
    %v329 = vld [vmem:[#allocation4 + $0x10] sm:$0xff]
    %v330 = vld [vmem:[#allocation4 + $0x18] sm:$0xff]
    %v331 = vld [vmem:[#allocation4 + $0x20] sm:$0xff]
    %v332 = vld [vmem:[#allocation4 + $0x28] sm:$0xff]
    %v333 = vld [vmem:[#allocation4 + $0x30] sm:$0xff]
    %v334 = vld [vmem:[#allocation4 + $0x38] sm:$0xff]
    %v335 = vld [vmem:[#allocation4 + $0x40] sm:$0xff]
    %v336 = vld [vmem:[#allocation4 + $0x48] sm:$0xff]
    %v337 = vld [vmem:[#allocation4 + $0x50] sm:$0xff]
    %v338 = vld [vmem:[#allocation4 + $0x58] sm:$0xff]
    %v339 = vld [vmem:[#allocation4 + $0x60] sm:$0xff]
    %v340 = vld [vmem:[#allocation4 + $0x68] sm:$0xff]
    %v341 = vld [vmem:[#allocation4 + $0x70] sm:$0xff]
    %v342 = vld [vmem:[#allocation4 + $0x78] sm:$0xff]
    %v343 = vld [vmem:[#allocation7] sm:$0xf]
    %v344 = vld [vmem:[#allocation7 + $0x4] sm:$0xf]
    %v345 = vld [vmem:[#allocation7 + $0x8] sm:$0xf]
    %v346 = vld [vmem:[#allocation7 + $0xc] sm:$0xf]
    %v347 = vld [vmem:[#allocation7 + $0x10] sm:$0xf]
    %v348 = vld [vmem:[#allocation7 + $0x14] sm:$0xf]
    %v349 = vld [vmem:[#allocation7 + $0x18] sm:$0xf]
    %v350 = vld [vmem:[#allocation7 + $0x1c] sm:$0xf]
    %v351 = vld [vmem:[#allocation7 + $0x20] sm:$0xf]
    %v352 = vld [vmem:[#allocation7 + $0x24] sm:$0xf]
    %v353 = vld [vmem:[#allocation7 + $0x28] sm:$0xf]
    %v354 = vld [vmem:[#allocation7 + $0x2c] sm:$0xf]
    %v355 = vld [vmem:[#allocation7 + $0x30] sm:$0xf]
    %v356 = vld [vmem:[#allocation7 + $0x34] sm:$0xf]
    %v357 = vld [vmem:[#allocation7 + $0x38] sm:$0xf]
    %v358 = vld [vmem:[#allocation7 + $0x3c] sm:$0xf]
    %v359 = vld [vmem:[%s5] sm:$0x3]
    %v361 = vlaneseq
    %v362 = vshrl.u32 %v361, 7
    %v363 = vsub.s32 0, %v362
    %v364 = vrot.slane %v359, %v363
    %v365 = vlaneseq
    %v366 = vshrl.u32 %v365, 7
    %v367 = vsub.s32 1, %v366
    %v368 = vrot.slane %v359, %v367
    %v371 = vld [vmem:[%s6] sm:$0x1]
    %v373 = vlaneseq
    %v374 = vshrl.u32 %v373, 7
    %v375 = vsub.s32 0, %v374
    %v376 = vrot.slane %v371, %v375
    %v378 = vld [vmem:[#allocation2] sm:$0xff]
    %s379 = smul.u32 0, 3
    %s380 = smul.addr %s379, 8
    %s381 = scalar_lea.vmem [#allocation3], %s380
    %v382 = vld [vmem:[%s381] sm:$0xff]
    %v383 = vld [vmem:[%s381 + $0x8] sm:$0xff]
    %v384 = vld [vmem:[%s381 + $0x10] sm:$0xff]
    %v385 = vpack.c.bf16 %v378, %v378
    %v402 = vunpack.c.l.b16 %v327
    %v403 = vunpack.c.h.b16 %v327
    %v404 = vunpack.c.l.b16 %v328
    %v405 = vunpack.c.h.b16 %v328
    %v406 = vunpack.c.l.b16 %v329
    %v407 = vunpack.c.h.b16 %v329
    %v408 = vunpack.c.l.b16 %v330
    %v409 = vunpack.c.h.b16 %v330
    %v410 = vunpack.c.l.b16 %v331
    %v411 = vunpack.c.h.b16 %v331
    %v412 = vunpack.c.l.b16 %v332
    %v413 = vunpack.c.h.b16 %v332
    %v414 = vunpack.c.l.b16 %v333
    %v415 = vunpack.c.h.b16 %v333
    %v416 = vunpack.c.l.b16 %v334
    %v417 = vunpack.c.h.b16 %v334
    %v418 = vunpack.c.l.b16 %v335
    %v419 = vunpack.c.h.b16 %v335
    %v420 = vunpack.c.l.b16 %v336
    %v421 = vunpack.c.h.b16 %v336
    %v422 = vunpack.c.l.b16 %v337
    %v423 = vunpack.c.h.b16 %v337
    %v424 = vunpack.c.l.b16 %v338
    %v425 = vunpack.c.h.b16 %v338
    %v426 = vunpack.c.l.b16 %v339
    %v427 = vunpack.c.h.b16 %v339
    %v428 = vunpack.c.l.b16 %v340
    %v429 = vunpack.c.h.b16 %v340
    %v430 = vunpack.c.l.b16 %v341
    %v431 = vunpack.c.h.b16 %v341
    %v432 = vunpack.c.l.b16 %v342
    %v433 = vunpack.c.h.b16 %v342
    %v434 = vpack.c.b16 %v404, %v402
    %v435 = vpack.c.b16 %v405, %v403
    %v436 = vpack.c.b16 %v408, %v406
    %v437 = vpack.c.b16 %v409, %v407
    %v438 = vpack.c.b16 %v412, %v410
    %v439 = vpack.c.b16 %v413, %v411
    %v440 = vpack.c.b16 %v416, %v414
    %v441 = vpack.c.b16 %v417, %v415
    %v442 = vpack.c.b16 %v420, %v418
    %v443 = vpack.c.b16 %v421, %v419
    %v444 = vpack.c.b16 %v424, %v422
    %v445 = vpack.c.b16 %v425, %v423
    %v446 = vpack.c.b16 %v428, %v426
    %v447 = vpack.c.b16 %v429, %v427
    %v448 = vpack.c.b16 %v432, %v430
    %v449 = vpack.c.b16 %v433, %v431
    %466 = vmatprep.subr.bf16.mxu0 %v449
    %467 = vmatpush1.bf16.msra.mxu0 %v448
    %468 = vmatprep.subr.bf16.mxu0 %v447
    %469 = vmatpush1.bf16.msra.mxu0 %v446
    %470 = vmatprep.subr.bf16.mxu0 %v445
    %471 = vmatpush1.bf16.msra.mxu0 %v444
    %472 = vmatprep.subr.bf16.mxu0 %v443
    %473 = vmatpush1.bf16.msra.mxu0 %v442
    %474 = vmatprep.subr.bf16.mxu0 %v441
    %475 = vmatpush1.bf16.msra.mxu0 %v440
    %476 = vmatprep.subr.bf16.mxu0 %v439
    %477 = vmatpush1.bf16.msra.mxu0 %v438
    %478 = vmatprep.subr.bf16.mxu0 %v437
    %479 = vmatpush1.bf16.msra.mxu0 %v436
    %480 = vmatprep.subr.bf16.mxu0 %v435
    %481 = vmatpush1.bf16.msra.mxu0 %v434
    %482 = vmatprep.subr.bf16.mxu0 0
    %483 = vmatpush2.bf16.msra.mxu0 0
    %484 = vmatprep.subr.bf16.mxu0 0
    %485 = vmatpush2.bf16.msra.mxu0 0
    %486 = vmatprep.subr.bf16.mxu0 0
    %487 = vmatpush2.bf16.msra.mxu0 0
    %488 = vmatprep.subr.bf16.mxu0 0
    %489 = vmatpush2.bf16.msra.mxu0 0
    %490 = vmatprep.subr.bf16.mxu0 0
    %491 = vmatpush2.bf16.msra.mxu0 0
    %492 = vmatprep.subr.bf16.mxu0 0
    %493 = vmatpush2.bf16.msra.mxu0 0
    %494 = vmatprep.subr.bf16.mxu0 0
    %495 = vmatpush2.bf16.msra.mxu0 0
    %496 = vmatprep.subr.bf16.mxu0 0
    %497 = vmatpush2.bf16.msra.mxu0 0
    %498 = vmatprep.mubr.bf16.mxu0 0
    %499 = vmatmul.mubr.bf16.gmra.mxu0 %v385
    %v500 = vpop.f32.mrf.mxu0
    %v501 = vadd.f32 %v364, %v500
    %v502 = vpop.f32.mrf.mxu0
    %v503 = vadd.f32 %v368, %v502
    %v504 = vpop.f32.mrf.mxu0
    %v505 = vpop.f32.mrf.mxu0
    %506 = vdwg.mxu0
    %v507 = vadd.f32 %v382, %v501
    %v508 = vxor.u32 %v507, 2147483648
    %v509 = vmul.f32 %v508, 1.442695
    %v510 = vpow.pop %v509
    %v511 = vadd.f32 %v510, 1.0
    %v512 = vrcp.pop %v511
    %v513 = vmul.f32 1.0, %v512
    %v514 = vadd.f32 %v383, %v503
    %v515 = vxor.u32 %v514, 2147483648
    %v516 = vmul.f32 %v515, 1.442695
    %v517 = vpow.pop %v516
    %v518 = vadd.f32 %v517, 1.0
    %v519 = vrcp.pop %v518
    %v520 = vmul.f32 1.0, %v519
    %v537 = vunpack.c.l.b16 %v343
    %v538 = vunpack.c.l.b16 %v344
    %v539 = vunpack.c.l.b16 %v345
    %v540 = vunpack.c.l.b16 %v346
    %v541 = vunpack.c.l.b16 %v347
    %v542 = vunpack.c.l.b16 %v348
    %v543 = vunpack.c.l.b16 %v349
    %v544 = vunpack.c.l.b16 %v350
    %v545 = vunpack.c.l.b16 %v351
    %v546 = vunpack.c.l.b16 %v352
    %v547 = vunpack.c.l.b16 %v353
    %v548 = vunpack.c.l.b16 %v354
    %v549 = vunpack.c.l.b16 %v355
    %v550 = vunpack.c.l.b16 %v356
    %v551 = vunpack.c.l.b16 %v357
    %v552 = vunpack.c.l.b16 %v358
    %v553 = vpack.c.b16 %v538, %v537
    %v554 = vpack.c.b16 %v540, %v539
    %v555 = vpack.c.b16 %v542, %v541
    %v556 = vpack.c.b16 %v544, %v543
    %v557 = vpack.c.b16 %v546, %v545
    %v558 = vpack.c.b16 %v548, %v547
    %v559 = vpack.c.b16 %v550, %v549
    %v560 = vpack.c.b16 %v552, %v551
    %569 = vmatprep.subr.bf16.mxu0 0
    %570 = vmatpush1.bf16.msra.mxu0 %v560
    %571 = vmatprep.subr.bf16.mxu0 0
    %572 = vmatpush1.bf16.msra.mxu0 %v559
    %573 = vmatprep.subr.bf16.mxu0 0
    %574 = vmatpush1.bf16.msra.mxu0 %v558
    %575 = vmatprep.subr.bf16.mxu0 0
    %576 = vmatpush1.bf16.msra.mxu0 %v557
    %577 = vmatprep.subr.bf16.mxu0 0
    %578 = vmatpush1.bf16.msra.mxu0 %v556
    %579 = vmatprep.subr.bf16.mxu0 0
    %580 = vmatpush1.bf16.msra.mxu0 %v555
    %581 = vmatprep.subr.bf16.mxu0 0
    %582 = vmatpush1.bf16.msra.mxu0 %v554
    %583 = vmatprep.subr.bf16.mxu0 0
    %584 = vmatpush1.bf16.msra.mxu0 %v553
    %585 = vmatprep.subr.bf16.mxu0 0
    %586 = vmatpush2.bf16.msra.mxu0 0
    %587 = vmatprep.subr.bf16.mxu0 0
    %588 = vmatpush2.bf16.msra.mxu0 0
    %589 = vmatprep.subr.bf16.mxu0 0
    %590 = vmatpush2.bf16.msra.mxu0 0
    %591 = vmatprep.subr.bf16.mxu0 0
    %592 = vmatpush2.bf16.msra.mxu0 0
    %593 = vmatprep.subr.bf16.mxu0 0
    %594 = vmatpush2.bf16.msra.mxu0 0
    %595 = vmatprep.subr.bf16.mxu0 0
    %596 = vmatpush2.bf16.msra.mxu0 0
    %597 = vmatprep.subr.bf16.mxu0 0
    %598 = vmatpush2.bf16.msra.mxu0 0
    %599 = vmatprep.subr.bf16.mxu0 0
    %600 = vmatpush2.bf16.msra.mxu0 0
    %601 = vmatprep.mubr.bf16.mxu0 0
    %602 = vmatmul.mubr.bf16.gmra.mxu0 %v385
    %v603 = vpop.f32.mrf.mxu0
    %v604 = vadd.f32 %v376, %v603
    %v605 = vpop.f32.mrf.mxu0
    %v606 = vpop.f32.mrf.mxu0
    %v607 = vpop.f32.mrf.mxu0
    %608 = vdwg.mxu0
    %v609 = vmul.f32 %v513, %v604
    %v610 = vadd.f32 %v384, %v609
    %v611 = vtanh.pop %v610
    %v612 = vsub.f32 %v378, %v611
    %v613 = vmul.f32 %v520, %v612
    %v614 = vadd.f32 %v611, %v613
    %615 = vst [vmem:[#allocation9] sm:$0xff] %v614
    %s616 = smul.u32 1, 3
    %s617 = smul.addr %s616, 8
    %s618 = scalar_lea.vmem [#allocation3], %s617
    %v619 = vld [vmem:[%s618] sm:$0xff]
    %v620 = vld [vmem:[%s618 + $0x8] sm:$0xff]
    %v621 = vld [vmem:[%s618 + $0x10] sm:$0xff]
    %v622 = vpack.c.bf16 %v614, %v614
    %623 = vmatprep.subr.bf16.mxu0 %v449
    %624 = vmatpush1.bf16.msra.mxu0 %v448
    %625 = vmatprep.subr.bf16.mxu0 %v447
    %626 = vmatpush1.bf16.msra.mxu0 %v446
    %627 = vmatprep.subr.bf16.mxu0 %v445
    %628 = vmatpush1.bf16.msra.mxu0 %v444
    %629 = vmatprep.subr.bf16.mxu0 %v443
    %630 = vmatpush1.bf16.msra.mxu0 %v442
    %631 = vmatprep.subr.bf16.mxu0 %v441
    %632 = vmatpush1.bf16.msra.mxu0 %v440
    %633 = vmatprep.subr.bf16.mxu0 %v439
    %634 = vmatpush1.bf16.msra.mxu0 %v438
    %635 = vmatprep.subr.bf16.mxu0 %v437
    %636 = vmatpush1.bf16.msra.mxu0 %v436
    %637 = vmatprep.subr.bf16.mxu0 %v435
    %638 = vmatpush1.bf16.msra.mxu0 %v434
    %639 = vmatprep.subr.bf16.mxu0 0
    %640 = vmatpush2.bf16.msra.mxu0 0
    %641 = vmatprep.subr.bf16.mxu0 0
    %642 = vmatpush2.bf16.msra.mxu0 0
    %643 = vmatprep.subr.bf16.mxu0 0
    %644 = vmatpush2.bf16.msra.mxu0 0
    %645 = vmatprep.subr.bf16.mxu0 0
    %646 = vmatpush2.bf16.msra.mxu0 0
    %647 = vmatprep.subr.bf16.mxu0 0
    %648 = vmatpush2.bf16.msra.mxu0 0
    %649 = vmatprep.subr.bf16.mxu0 0
    %650 = vmatpush2.bf16.msra.mxu0 0
    %651 = vmatprep.subr.bf16.mxu0 0
    %652 = vmatpush2.bf16.msra.mxu0 0
    %653 = vmatprep.subr.bf16.mxu0 0
    %654 = vmatpush2.bf16.msra.mxu0 0
    %655 = vmatprep.mubr.bf16.mxu0 0
    %656 = vmatmul.mubr.bf16.gmra.mxu0 %v622
    %v657 = vpop.f32.mrf.mxu0
    %v658 = vadd.f32 %v364, %v657
    %v659 = vpop.f32.mrf.mxu0
    %v660 = vadd.f32 %v368, %v659
    %v661 = vpop.f32.mrf.mxu0
    %v662 = vpop.f32.mrf.mxu0
    %663 = vdwg.mxu0
    %v664 = vadd.f32 %v619, %v658
    %v665 = vxor.u32 %v664, 2147483648
    %v666 = vmul.f32 %v665, 1.442695
    %v667 = vpow.pop %v666
    %v668 = vadd.f32 %v667, 1.0
    %v669 = vrcp.pop %v668
    %v670 = vmul.f32 1.0, %v669
    %v671 = vadd.f32 %v620, %v660
    %v672 = vxor.u32 %v671, 2147483648
    %v673 = vmul.f32 %v672, 1.442695
    %v674 = vpow.pop %v673
    %v675 = vadd.f32 %v674, 1.0
    %v676 = vrcp.pop %v675
    %v677 = vmul.f32 1.0, %v676
    %678 = vmatprep.subr.bf16.mxu0 0
    %679 = vmatpush1.bf16.msra.mxu0 %v560
    %680 = vmatprep.subr.bf16.mxu0 0
    %681 = vmatpush1.bf16.msra.mxu0 %v559
    %682 = vmatprep.subr.bf16.mxu0 0
    %683 = vmatpush1.bf16.msra.mxu0 %v558
    %684 = vmatprep.subr.bf16.mxu0 0
    %685 = vmatpush1.bf16.msra.mxu0 %v557
    %686 = vmatprep.subr.bf16.mxu0 0
    %687 = vmatpush1.bf16.msra.mxu0 %v556
    %688 = vmatprep.subr.bf16.mxu0 0
    %689 = vmatpush1.bf16.msra.mxu0 %v555
    %690 = vmatprep.subr.bf16.mxu0 0
    %691 = vmatpush1.bf16.msra.mxu0 %v554
    %692 = vmatprep.subr.bf16.mxu0 0
    %693 = vmatpush1.bf16.msra.mxu0 %v553
    %694 = vmatprep.subr.bf16.mxu0 0
    %695 = vmatpush2.bf16.msra.mxu0 0
    %696 = vmatprep.subr.bf16.mxu0 0
    %697 = vmatpush2.bf16.msra.mxu0 0
    %698 = vmatprep.subr.bf16.mxu0 0
    %699 = vmatpush2.bf16.msra.mxu0 0
    %700 = vmatprep.subr.bf16.mxu0 0
    %701 = vmatpush2.bf16.msra.mxu0 0
    %702 = vmatprep.subr.bf16.mxu0 0
    %703 = vmatpush2.bf16.msra.mxu0 0
    %704 = vmatprep.subr.bf16.mxu0 0
    %705 = vmatpush2.bf16.msra.mxu0 0
    %706 = vmatprep.subr.bf16.mxu0 0
    %707 = vmatpush2.bf16.msra.mxu0 0
    %708 = vmatprep.subr.bf16.mxu0 0
    %709 = vmatpush2.bf16.msra.mxu0 0
    %710 = vmatprep.mubr.bf16.mxu0 0
    %711 = vmatmul.mubr.bf16.gmra.mxu0 %v622
    %v712 = vpop.f32.mrf.mxu0
    %v713 = vadd.f32 %v376, %v712
    %v714 = vpop.f32.mrf.mxu0
    %v715 = vpop.f32.mrf.mxu0
    %v716 = vpop.f32.mrf.mxu0
    %717 = vdwg.mxu0
    %v718 = vmul.f32 %v670, %v713
    %v719 = vadd.f32 %v621, %v718
    %v720 = vtanh.pop %v719
    %v721 = vsub.f32 %v614, %v720
    %v722 = vmul.f32 %v677, %v721
    %v723 = vadd.f32 %v720, %v722
    %s724 = scalar_lea.vmem [#allocation9], 8
    %725 = vst [vmem:[%s724] sm:$0xff] %v723
    %s726 = smul.u32 2, 3
    %s727 = smul.addr %s726, 8
    %s728 = scalar_lea.vmem [#allocation3], %s727
    %v729 = vld [vmem:[%s728] sm:$0xff]
    %v730 = vld [vmem:[%s728 + $0x8] sm:$0xff]
    %v731 = vld [vmem:[%s728 + $0x10] sm:$0xff]
    %v732 = vpack.c.bf16 %v723, %v723
    %733 = vmatprep.subr.bf16.mxu0 %v449
    %734 = vmatpush1.bf16.msra.mxu0 %v448
    %735 = vmatprep.subr.bf16.mxu0 %v447
    %736 = vmatpush1.bf16.msra.mxu0 %v446
    %737 = vmatprep.subr.bf16.mxu0 %v445
    %738 = vmatpush1.bf16.msra.mxu0 %v444
    %739 = vmatprep.subr.bf16.mxu0 %v443
    %740 = vmatpush1.bf16.msra.mxu0 %v442
    %741 = vmatprep.subr.bf16.mxu0 %v441
    %742 = vmatpush1.bf16.msra.mxu0 %v440
    %743 = vmatprep.subr.bf16.mxu0 %v439
    %744 = vmatpush1.bf16.msra.mxu0 %v438
    %745 = vmatprep.subr.bf16.mxu0 %v437
    %746 = vmatpush1.bf16.msra.mxu0 %v436
    %747 = vmatprep.subr.bf16.mxu0 %v435
    %748 = vmatpush1.bf16.msra.mxu0 %v434
    %749 = vmatprep.subr.bf16.mxu0 0
    %750 = vmatpush2.bf16.msra.mxu0 0
    %751 = vmatprep.subr.bf16.mxu0 0
    %752 = vmatpush2.bf16.msra.mxu0 0
    %753 = vmatprep.subr.bf16.mxu0 0
    %754 = vmatpush2.bf16.msra.mxu0 0
    %755 = vmatprep.subr.bf16.mxu0 0
    %756 = vmatpush2.bf16.msra.mxu0 0
    %757 = vmatprep.subr.bf16.mxu0 0
    %758 = vmatpush2.bf16.msra.mxu0 0
    %759 = vmatprep.subr.bf16.mxu0 0
    %760 = vmatpush2.bf16.msra.mxu0 0
    %761 = vmatprep.subr.bf16.mxu0 0
    %762 = vmatpush2.bf16.msra.mxu0 0
    %763 = vmatprep.subr.bf16.mxu0 0
    %764 = vmatpush2.bf16.msra.mxu0 0
    %765 = vmatprep.mubr.bf16.mxu0 0
    %766 = vmatmul.mubr.bf16.gmra.mxu0 %v732
    %v767 = vpop.f32.mrf.mxu0
    %v768 = vadd.f32 %v364, %v767
    %v769 = vpop.f32.mrf.mxu0
    %v770 = vadd.f32 %v368, %v769
    %v771 = vpop.f32.mrf.mxu0
    %v772 = vpop.f32.mrf.mxu0
    %773 = vdwg.mxu0
    %v774 = vadd.f32 %v729, %v768
    %v775 = vxor.u32 %v774, 2147483648
    %v776 = vmul.f32 %v775, 1.442695
    %v777 = vpow.pop %v776
    %v778 = vadd.f32 %v777, 1.0
    %v779 = vrcp.pop %v778
    %v780 = vmul.f32 1.0, %v779
    %v781 = vadd.f32 %v730, %v770
    %v782 = vxor.u32 %v781, 2147483648
    %v783 = vmul.f32 %v782, 1.442695
    %v784 = vpow.pop %v783
    %v785 = vadd.f32 %v784, 1.0
    %v786 = vrcp.pop %v785
    %v787 = vmul.f32 1.0, %v786
    %788 = vmatprep.subr.bf16.mxu0 0
    %789 = vmatpush1.bf16.msra.mxu0 %v560
    %790 = vmatprep.subr.bf16.mxu0 0
    %791 = vmatpush1.bf16.msra.mxu0 %v559
    %792 = vmatprep.subr.bf16.mxu0 0
    %793 = vmatpush1.bf16.msra.mxu0 %v558
    %794 = vmatprep.subr.bf16.mxu0 0
    %795 = vmatpush1.bf16.msra.mxu0 %v557
    %796 = vmatprep.subr.bf16.mxu0 0
    %797 = vmatpush1.bf16.msra.mxu0 %v556
    %798 = vmatprep.subr.bf16.mxu0 0
    %799 = vmatpush1.bf16.msra.mxu0 %v555
    %800 = vmatprep.subr.bf16.mxu0 0
    %801 = vmatpush1.bf16.msra.mxu0 %v554
    %802 = vmatprep.subr.bf16.mxu0 0
    %803 = vmatpush1.bf16.msra.mxu0 %v553
    %804 = vmatprep.subr.bf16.mxu0 0
    %805 = vmatpush2.bf16.msra.mxu0 0
    %806 = vmatprep.subr.bf16.mxu0 0
    %807 = vmatpush2.bf16.msra.mxu0 0
    %808 = vmatprep.subr.bf16.mxu0 0
    %809 = vmatpush2.bf16.msra.mxu0 0
    %810 = vmatprep.subr.bf16.mxu0 0
    %811 = vmatpush2.bf16.msra.mxu0 0
    %812 = vmatprep.subr.bf16.mxu0 0
    %813 = vmatpush2.bf16.msra.mxu0 0
    %814 = vmatprep.subr.bf16.mxu0 0
    %815 = vmatpush2.bf16.msra.mxu0 0
    %816 = vmatprep.subr.bf16.mxu0 0
    %817 = vmatpush2.bf16.msra.mxu0 0
    %818 = vmatprep.subr.bf16.mxu0 0
    %819 = vmatpush2.bf16.msra.mxu0 0
    %820 = vmatprep.mubr.bf16.mxu0 0
    %821 = vmatmul.mubr.bf16.gmra.mxu0 %v732
    %v822 = vpop.f32.mrf.mxu0
    %v823 = vadd.f32 %v376, %v822
    %v824 = vpop.f32.mrf.mxu0
    %v825 = vpop.f32.mrf.mxu0
    %v826 = vpop.f32.mrf.mxu0
    %827 = vdwg.mxu0
    %v828 = vmul.f32 %v780, %v823
    %v829 = vadd.f32 %v731, %v828
    %v830 = vtanh.pop %v829
    %v831 = vsub.f32 %v723, %v830
    %v832 = vmul.f32 %v787, %v831
    %v833 = vadd.f32 %v830, %v832
    %s834 = scalar_lea.vmem [#allocation9], 16
    %835 = vst [vmem:[%s834] sm:$0xff] %v833
    %s836 = smul.u32 3, 3
    %s837 = smul.addr %s836, 8
    %s838 = scalar_lea.vmem [#allocation3], %s837
    %v839 = vld [vmem:[%s838] sm:$0xff]
    %v840 = vld [vmem:[%s838 + $0x8] sm:$0xff]
    %v841 = vld [vmem:[%s838 + $0x10] sm:$0xff]
    %v842 = vpack.c.bf16 %v833, %v833
    %843 = vmatprep.subr.bf16.mxu0 %v449
    %844 = vmatpush1.bf16.msra.mxu0 %v448
    %845 = vmatprep.subr.bf16.mxu0 %v447
    %846 = vmatpush1.bf16.msra.mxu0 %v446
    %847 = vmatprep.subr.bf16.mxu0 %v445
    %848 = vmatpush1.bf16.msra.mxu0 %v444
    %849 = vmatprep.subr.bf16.mxu0 %v443
    %850 = vmatpush1.bf16.msra.mxu0 %v442
    %851 = vmatprep.subr.bf16.mxu0 %v441
    %852 = vmatpush1.bf16.msra.mxu0 %v440
    %853 = vmatprep.subr.bf16.mxu0 %v439
    %854 = vmatpush1.bf16.msra.mxu0 %v438
    %855 = vmatprep.subr.bf16.mxu0 %v437
    %856 = vmatpush1.bf16.msra.mxu0 %v436
    %857 = vmatprep.subr.bf16.mxu0 %v435
    %858 = vmatpush1.bf16.msra.mxu0 %v434
    %859 = vmatprep.subr.bf16.mxu0 0
    %860 = vmatpush2.bf16.msra.mxu0 0
    %861 = vmatprep.subr.bf16.mxu0 0
    %862 = vmatpush2.bf16.msra.mxu0 0
    %863 = vmatprep.subr.bf16.mxu0 0
    %864 = vmatpush2.bf16.msra.mxu0 0
    %865 = vmatprep.subr.bf16.mxu0 0
    %866 = vmatpush2.bf16.msra.mxu0 0
    %867 = vmatprep.subr.bf16.mxu0 0
    %868 = vmatpush2.bf16.msra.mxu0 0
    %869 = vmatprep.subr.bf16.mxu0 0
    %870 = vmatpush2.bf16.msra.mxu0 0
    %871 = vmatprep.subr.bf16.mxu0 0
    %872 = vmatpush2.bf16.msra.mxu0 0
    %873 = vmatprep.subr.bf16.mxu0 0
    %874 = vmatpush2.bf16.msra.mxu0 0
    %875 = vmatprep.mubr.bf16.mxu0 0
    %876 = vmatmul.mubr.bf16.gmra.mxu0 %v842
    %v877 = vpop.f32.mrf.mxu0
    %v878 = vadd.f32 %v364, %v877
    %v879 = vpop.f32.mrf.mxu0
    %v880 = vadd.f32 %v368, %v879
    %v881 = vpop.f32.mrf.mxu0
    %v882 = vpop.f32.mrf.mxu0
    %883 = vdwg.mxu0
    %v884 = vadd.f32 %v839, %v878
    %v885 = vxor.u32 %v884, 2147483648
    %v886 = vmul.f32 %v885, 1.442695
    %v887 = vpow.pop %v886
    %v888 = vadd.f32 %v887, 1.0
    %v889 = vrcp.pop %v888
    %v890 = vmul.f32 1.0, %v889
    %v891 = vadd.f32 %v840, %v880
    %v892 = vxor.u32 %v891, 2147483648
    %v893 = vmul.f32 %v892, 1.442695
    %v894 = vpow.pop %v893
    %v895 = vadd.f32 %v894, 1.0
    %v896 = vrcp.pop %v895
    %v897 = vmul.f32 1.0, %v896
    %898 = vmatprep.subr.bf16.mxu0 0
    %899 = vmatpush1.bf16.msra.mxu0 %v560
    %900 = vmatprep.subr.bf16.mxu0 0
    %901 = vmatpush1.bf16.msra.mxu0 %v559
    %902 = vmatprep.subr.bf16.mxu0 0
    %903 = vmatpush1.bf16.msra.mxu0 %v558
    %904 = vmatprep.subr.bf16.mxu0 0
    %905 = vmatpush1.bf16.msra.mxu0 %v557
    %906 = vmatprep.subr.bf16.mxu0 0
    %907 = vmatpush1.bf16.msra.mxu0 %v556
    %908 = vmatprep.subr.bf16.mxu0 0
    %909 = vmatpush1.bf16.msra.mxu0 %v555
    %910 = vmatprep.subr.bf16.mxu0 0
    %911 = vmatpush1.bf16.msra.mxu0 %v554
    %912 = vmatprep.subr.bf16.mxu0 0
    %913 = vmatpush1.bf16.msra.mxu0 %v553
    %914 = vmatprep.subr.bf16.mxu0 0
    %915 = vmatpush2.bf16.msra.mxu0 0
    %916 = vmatprep.subr.bf16.mxu0 0
    %917 = vmatpush2.bf16.msra.mxu0 0
    %918 = vmatprep.subr.bf16.mxu0 0
    %919 = vmatpush2.bf16.msra.mxu0 0
    %920 = vmatprep.subr.bf16.mxu0 0
    %921 = vmatpush2.bf16.msra.mxu0 0
    %922 = vmatprep.subr.bf16.mxu0 0
    %923 = vmatpush2.bf16.msra.mxu0 0
    %924 = vmatprep.subr.bf16.mxu0 0
    %925 = vmatpush2.bf16.msra.mxu0 0
    %926 = vmatprep.subr.bf16.mxu0 0
    %927 = vmatpush2.bf16.msra.mxu0 0
    %928 = vmatprep.subr.bf16.mxu0 0
    %929 = vmatpush2.bf16.msra.mxu0 0
    %930 = vmatprep.mubr.bf16.mxu0 0
    %931 = vmatmul.mubr.bf16.gmra.mxu0 %v842
    %v932 = vpop.f32.mrf.mxu0
    %v933 = vadd.f32 %v376, %v932
    %v934 = vpop.f32.mrf.mxu0
    %v935 = vpop.f32.mrf.mxu0
    %v936 = vpop.f32.mrf.mxu0
    %937 = vdwg.mxu0
    %v938 = vmul.f32 %v890, %v933
    %v939 = vadd.f32 %v841, %v938
    %v940 = vtanh.pop %v939
    %v941 = vsub.f32 %v833, %v940
    %v942 = vmul.f32 %v897, %v941
    %v943 = vadd.f32 %v940, %v942
    %s944 = scalar_lea.vmem [#allocation9], 24
    %945 = vst [vmem:[%s944] sm:$0xff] %v943
    %s946 = smul.u32 4, 3
    %s947 = smul.addr %s946, 8
    %s948 = scalar_lea.vmem [#allocation3], %s947
    %v949 = vld [vmem:[%s948] sm:$0xff]
    %v950 = vld [vmem:[%s948 + $0x8] sm:$0xff]
    %v951 = vld [vmem:[%s948 + $0x10] sm:$0xff]
    %v952 = vpack.c.bf16 %v943, %v943
    %953 = vmatprep.subr.bf16.mxu0 %v449
    %954 = vmatpush1.bf16.msra.mxu0 %v448
    %955 = vmatprep.subr.bf16.mxu0 %v447
    %956 = vmatpush1.bf16.msra.mxu0 %v446
    %957 = vmatprep.subr.bf16.mxu0 %v445
    %958 = vmatpush1.bf16.msra.mxu0 %v444
    %959 = vmatprep.subr.bf16.mxu0 %v443
    %960 = vmatpush1.bf16.msra.mxu0 %v442
    %961 = vmatprep.subr.bf16.mxu0 %v441
    %962 = vmatpush1.bf16.msra.mxu0 %v440
    %963 = vmatprep.subr.bf16.mxu0 %v439
    %964 = vmatpush1.bf16.msra.mxu0 %v438
    %965 = vmatprep.subr.bf16.mxu0 %v437
    %966 = vmatpush1.bf16.msra.mxu0 %v436
    %967 = vmatprep.subr.bf16.mxu0 %v435
    %968 = vmatpush1.bf16.msra.mxu0 %v434
    %969 = vmatprep.subr.bf16.mxu0 0
    %970 = vmatpush2.bf16.msra.mxu0 0
    %971 = vmatprep.subr.bf16.mxu0 0
    %972 = vmatpush2.bf16.msra.mxu0 0
    %973 = vmatprep.subr.bf16.mxu0 0
    %974 = vmatpush2.bf16.msra.mxu0 0
    %975 = vmatprep.subr.bf16.mxu0 0
    %976 = vmatpush2.bf16.msra.mxu0 0
    %977 = vmatprep.subr.bf16.mxu0 0
    %978 = vmatpush2.bf16.msra.mxu0 0
    %979 = vmatprep.subr.bf16.mxu0 0
    %980 = vmatpush2.bf16.msra.mxu0 0
    %981 = vmatprep.subr.bf16.mxu0 0
    %982 = vmatpush2.bf16.msra.mxu0 0
    %983 = vmatprep.subr.bf16.mxu0 0
    %984 = vmatpush2.bf16.msra.mxu0 0
    %985 = vmatprep.mubr.bf16.mxu0 0
    %986 = vmatmul.mubr.bf16.gmra.mxu0 %v952
    %v987 = vpop.f32.mrf.mxu0
    %v988 = vadd.f32 %v364, %v987
    %v989 = vpop.f32.mrf.mxu0
    %v990 = vadd.f32 %v368, %v989
    %v991 = vpop.f32.mrf.mxu0
    %v992 = vpop.f32.mrf.mxu0
    %993 = vdwg.mxu0
    %v994 = vadd.f32 %v949, %v988
    %v995 = vxor.u32 %v994, 2147483648
    %v996 = vmul.f32 %v995, 1.442695
    %v997 = vpow.pop %v996
    %v998 = vadd.f32 %v997, 1.0
    %v999 = vrcp.pop %v998
    %v1000 = vmul.f32 1.0, %v999
    %v1001 = vadd.f32 %v950, %v990
    %v1002 = vxor.u32 %v1001, 2147483648
    %v1003 = vmul.f32 %v1002, 1.442695
    %v1004 = vpow.pop %v1003
    %v1005 = vadd.f32 %v1004, 1.0
    %v1006 = vrcp.pop %v1005
    %v1007 = vmul.f32 1.0, %v1006
    %1008 = vmatprep.subr.bf16.mxu0 0
    %1009 = vmatpush1.bf16.msra.mxu0 %v560
    %1010 = vmatprep.subr.bf16.mxu0 0
    %1011 = vmatpush1.bf16.msra.mxu0 %v559
    %1012 = vmatprep.subr.bf16.mxu0 0
    %1013 = vmatpush1.bf16.msra.mxu0 %v558
    %1014 = vmatprep.subr.bf16.mxu0 0
    %1015 = vmatpush1.bf16.msra.mxu0 %v557
    %1016 = vmatprep.subr.bf16.mxu0 0
    %1017 = vmatpush1.bf16.msra.mxu0 %v556
    %1018 = vmatprep.subr.bf16.mxu0 0
    %1019 = vmatpush1.bf16.msra.mxu0 %v555
    %1020 = vmatprep.subr.bf16.mxu0 0
    %1021 = vmatpush1.bf16.msra.mxu0 %v554
    %1022 = vmatprep.subr.bf16.mxu0 0
    %1023 = vmatpush1.bf16.msra.mxu0 %v553
    %1024 = vmatprep.subr.bf16.mxu0 0
    %1025 = vmatpush2.bf16.msra.mxu0 0
    %1026 = vmatprep.subr.bf16.mxu0 0
    %1027 = vmatpush2.bf16.msra.mxu0 0
    %1028 = vmatprep.subr.bf16.mxu0 0
    %1029 = vmatpush2.bf16.msra.mxu0 0
    %1030 = vmatprep.subr.bf16.mxu0 0
    %1031 = vmatpush2.bf16.msra.mxu0 0
    %1032 = vmatprep.subr.bf16.mxu0 0
    %1033 = vmatpush2.bf16.msra.mxu0 0
    %1034 = vmatprep.subr.bf16.mxu0 0
    %1035 = vmatpush2.bf16.msra.mxu0 0
    %1036 = vmatprep.subr.bf16.mxu0 0
    %1037 = vmatpush2.bf16.msra.mxu0 0
    %1038 = vmatprep.subr.bf16.mxu0 0
    %1039 = vmatpush2.bf16.msra.mxu0 0
    %1040 = vmatprep.mubr.bf16.mxu0 0
    %1041 = vmatmul.mubr.bf16.gmra.mxu0 %v952
    %v1042 = vpop.f32.mrf.mxu0
    %v1043 = vadd.f32 %v376, %v1042
    %v1044 = vpop.f32.mrf.mxu0
    %v1045 = vpop.f32.mrf.mxu0
    %v1046 = vpop.f32.mrf.mxu0
    %1047 = vdwg.mxu0
    %v1048 = vmul.f32 %v1000, %v1043
    %v1049 = vadd.f32 %v951, %v1048
    %v1050 = vtanh.pop %v1049
    %v1051 = vsub.f32 %v943, %v1050
    %v1052 = vmul.f32 %v1007, %v1051
    %v1053 = vadd.f32 %v1050, %v1052
    %s1054 = scalar_lea.vmem [#allocation9], 32
    %1055 = vst [vmem:[%s1054] sm:$0xff] %v1053
    %s1056 = smul.u32 5, 3
    %s1057 = smul.addr %s1056, 8
    %s1058 = scalar_lea.vmem [#allocation3], %s1057
    %v1059 = vld [vmem:[%s1058] sm:$0xff]
    %v1060 = vld [vmem:[%s1058 + $0x8] sm:$0xff]
    %v1061 = vld [vmem:[%s1058 + $0x10] sm:$0xff]
    %v1062 = vpack.c.bf16 %v1053, %v1053
    %1063 = vmatprep.subr.bf16.mxu0 %v449
    %1064 = vmatpush1.bf16.msra.mxu0 %v448
    %1065 = vmatprep.subr.bf16.mxu0 %v447
    %1066 = vmatpush1.bf16.msra.mxu0 %v446
    %1067 = vmatprep.subr.bf16.mxu0 %v445
    %1068 = vmatpush1.bf16.msra.mxu0 %v444
    %1069 = vmatprep.subr.bf16.mxu0 %v443
    %1070 = vmatpush1.bf16.msra.mxu0 %v442
    %1071 = vmatprep.subr.bf16.mxu0 %v441
    %1072 = vmatpush1.bf16.msra.mxu0 %v440
    %1073 = vmatprep.subr.bf16.mxu0 %v439
    %1074 = vmatpush1.bf16.msra.mxu0 %v438
    %1075 = vmatprep.subr.bf16.mxu0 %v437
    %1076 = vmatpush1.bf16.msra.mxu0 %v436
    %1077 = vmatprep.subr.bf16.mxu0 %v435
    %1078 = vmatpush1.bf16.msra.mxu0 %v434
    %1079 = vmatprep.subr.bf16.mxu0 0
    %1080 = vmatpush2.bf16.msra.mxu0 0
    %1081 = vmatprep.subr.bf16.mxu0 0
    %1082 = vmatpush2.bf16.msra.mxu0 0
    %1083 = vmatprep.subr.bf16.mxu0 0
    %1084 = vmatpush2.bf16.msra.mxu0 0
    %1085 = vmatprep.subr.bf16.mxu0 0
    %1086 = vmatpush2.bf16.msra.mxu0 0
    %1087 = vmatprep.subr.bf16.mxu0 0
    %1088 = vmatpush2.bf16.msra.mxu0 0
    %1089 = vmatprep.subr.bf16.mxu0 0
    %1090 = vmatpush2.bf16.msra.mxu0 0
    %1091 = vmatprep.subr.bf16.mxu0 0
    %1092 = vmatpush2.bf16.msra.mxu0 0
    %1093 = vmatprep.subr.bf16.mxu0 0
    %1094 = vmatpush2.bf16.msra.mxu0 0
    %1095 = vmatprep.mubr.bf16.mxu0 0
    %1096 = vmatmul.mubr.bf16.gmra.mxu0 %v1062
    %v1097 = vpop.f32.mrf.mxu0
    %v1098 = vadd.f32 %v364, %v1097
    %v1099 = vpop.f32.mrf.mxu0
    %v1100 = vadd.f32 %v368, %v1099
    %v1101 = vpop.f32.mrf.mxu0
    %v1102 = vpop.f32.mrf.mxu0
    %1103 = vdwg.mxu0
    %v1104 = vadd.f32 %v1059, %v1098
    %v1105 = vxor.u32 %v1104, 2147483648
    %v1106 = vmul.f32 %v1105, 1.442695
    %v1107 = vpow.pop %v1106
    %v1108 = vadd.f32 %v1107, 1.0
    %v1109 = vrcp.pop %v1108
    %v1110 = vmul.f32 1.0, %v1109
    %v1111 = vadd.f32 %v1060, %v1100
    %v1112 = vxor.u32 %v1111, 2147483648
    %v1113 = vmul.f32 %v1112, 1.442695
    %v1114 = vpow.pop %v1113
    %v1115 = vadd.f32 %v1114, 1.0
    %v1116 = vrcp.pop %v1115
    %v1117 = vmul.f32 1.0, %v1116
    %1118 = vmatprep.subr.bf16.mxu0 0
    %1119 = vmatpush1.bf16.msra.mxu0 %v560
    %1120 = vmatprep.subr.bf16.mxu0 0
    %1121 = vmatpush1.bf16.msra.mxu0 %v559
    %1122 = vmatprep.subr.bf16.mxu0 0
    %1123 = vmatpush1.bf16.msra.mxu0 %v558
    %1124 = vmatprep.subr.bf16.mxu0 0
    %1125 = vmatpush1.bf16.msra.mxu0 %v557
    %1126 = vmatprep.subr.bf16.mxu0 0
    %1127 = vmatpush1.bf16.msra.mxu0 %v556
    %1128 = vmatprep.subr.bf16.mxu0 0
    %1129 = vmatpush1.bf16.msra.mxu0 %v555
    %1130 = vmatprep.subr.bf16.mxu0 0
    %1131 = vmatpush1.bf16.msra.mxu0 %v554
    %1132 = vmatprep.subr.bf16.mxu0 0
    %1133 = vmatpush1.bf16.msra.mxu0 %v553
    %1134 = vmatprep.subr.bf16.mxu0 0
    %1135 = vmatpush2.bf16.msra.mxu0 0
    %1136 = vmatprep.subr.bf16.mxu0 0
    %1137 = vmatpush2.bf16.msra.mxu0 0
    %1138 = vmatprep.subr.bf16.mxu0 0
    %1139 = vmatpush2.bf16.msra.mxu0 0
    %1140 = vmatprep.subr.bf16.mxu0 0
    %1141 = vmatpush2.bf16.msra.mxu0 0
    %1142 = vmatprep.subr.bf16.mxu0 0
    %1143 = vmatpush2.bf16.msra.mxu0 0
    %1144 = vmatprep.subr.bf16.mxu0 0
    %1145 = vmatpush2.bf16.msra.mxu0 0
    %1146 = vmatprep.subr.bf16.mxu0 0
    %1147 = vmatpush2.bf16.msra.mxu0 0
    %1148 = vmatprep.subr.bf16.mxu0 0
    %1149 = vmatpush2.bf16.msra.mxu0 0
    %1150 = vmatprep.mubr.bf16.mxu0 0
    %1151 = vmatmul.mubr.bf16.gmra.mxu0 %v1062
    %v1152 = vpop.f32.mrf.mxu0
    %v1153 = vadd.f32 %v376, %v1152
    %v1154 = vpop.f32.mrf.mxu0
    %v1155 = vpop.f32.mrf.mxu0
    %v1156 = vpop.f32.mrf.mxu0
    %1157 = vdwg.mxu0
    %v1158 = vmul.f32 %v1110, %v1153
    %v1159 = vadd.f32 %v1061, %v1158
    %v1160 = vtanh.pop %v1159
    %v1161 = vsub.f32 %v1053, %v1160
    %v1162 = vmul.f32 %v1117, %v1161
    %v1163 = vadd.f32 %v1160, %v1162
    %s1164 = scalar_lea.vmem [#allocation9], 40
    %1165 = vst [vmem:[%s1164] sm:$0xff] %v1163
    %s1166 = smul.u32 6, 3
    %s1167 = smul.addr %s1166, 8
    %s1168 = scalar_lea.vmem [#allocation3], %s1167
    %v1169 = vld [vmem:[%s1168] sm:$0xff]
    %v1170 = vld [vmem:[%s1168 + $0x8] sm:$0xff]
    %v1171 = vld [vmem:[%s1168 + $0x10] sm:$0xff]
    %v1172 = vpack.c.bf16 %v1163, %v1163
    %1173 = vmatprep.subr.bf16.mxu0 %v449
    %1174 = vmatpush1.bf16.msra.mxu0 %v448
    %1175 = vmatprep.subr.bf16.mxu0 %v447
    %1176 = vmatpush1.bf16.msra.mxu0 %v446
    %1177 = vmatprep.subr.bf16.mxu0 %v445
    %1178 = vmatpush1.bf16.msra.mxu0 %v444
    %1179 = vmatprep.subr.bf16.mxu0 %v443
    %1180 = vmatpush1.bf16.msra.mxu0 %v442
    %1181 = vmatprep.subr.bf16.mxu0 %v441
    %1182 = vmatpush1.bf16.msra.mxu0 %v440
    %1183 = vmatprep.subr.bf16.mxu0 %v439
    %1184 = vmatpush1.bf16.msra.mxu0 %v438
    %1185 = vmatprep.subr.bf16.mxu0 %v437
    %1186 = vmatpush1.bf16.msra.mxu0 %v436
    %1187 = vmatprep.subr.bf16.mxu0 %v435
    %1188 = vmatpush1.bf16.msra.mxu0 %v434
    %1189 = vmatprep.subr.bf16.mxu0 0
    %1190 = vmatpush2.bf16.msra.mxu0 0
    %1191 = vmatprep.subr.bf16.mxu0 0
    %1192 = vmatpush2.bf16.msra.mxu0 0
    %1193 = vmatprep.subr.bf16.mxu0 0
    %1194 = vmatpush2.bf16.msra.mxu0 0
    %1195 = vmatprep.subr.bf16.mxu0 0
    %1196 = vmatpush2.bf16.msra.mxu0 0
    %1197 = vmatprep.subr.bf16.mxu0 0
    %1198 = vmatpush2.bf16.msra.mxu0 0
    %1199 = vmatprep.subr.bf16.mxu0 0
    %1200 = vmatpush2.bf16.msra.mxu0 0
    %1201 = vmatprep.subr.bf16.mxu0 0
    %1202 = vmatpush2.bf16.msra.mxu0 0
    %1203 = vmatprep.subr.bf16.mxu0 0
    %1204 = vmatpush2.bf16.msra.mxu0 0
    %1205 = vmatprep.mubr.bf16.mxu0 0
    %1206 = vmatmul.mubr.bf16.gmra.mxu0 %v1172
    %v1207 = vpop.f32.mrf.mxu0
    %v1208 = vadd.f32 %v364, %v1207
    %v1209 = vpop.f32.mrf.mxu0
    %v1210 = vadd.f32 %v368, %v1209
    %v1211 = vpop.f32.mrf.mxu0
    %v1212 = vpop.f32.mrf.mxu0
    %1213 = vdwg.mxu0
    %v1214 = vadd.f32 %v1169, %v1208
    %v1215 = vxor.u32 %v1214, 2147483648
    %v1216 = vmul.f32 %v1215, 1.442695
    %v1217 = vpow.pop %v1216
    %v1218 = vadd.f32 %v1217, 1.0
    %v1219 = vrcp.pop %v1218
    %v1220 = vmul.f32 1.0, %v1219
    %v1221 = vadd.f32 %v1170, %v1210
    %v1222 = vxor.u32 %v1221, 2147483648
    %v1223 = vmul.f32 %v1222, 1.442695
    %v1224 = vpow.pop %v1223
    %v1225 = vadd.f32 %v1224, 1.0
    %v1226 = vrcp.pop %v1225
    %v1227 = vmul.f32 1.0, %v1226
    %1228 = vmatprep.subr.bf16.mxu0 0
    %1229 = vmatpush1.bf16.msra.mxu0 %v560
    %1230 = vmatprep.subr.bf16.mxu0 0
    %1231 = vmatpush1.bf16.msra.mxu0 %v559
    %1232 = vmatprep.subr.bf16.mxu0 0
    %1233 = vmatpush1.bf16.msra.mxu0 %v558
    %1234 = vmatprep.subr.bf16.mxu0 0
    %1235 = vmatpush1.bf16.msra.mxu0 %v557
    %1236 = vmatprep.subr.bf16.mxu0 0
    %1237 = vmatpush1.bf16.msra.mxu0 %v556
    %1238 = vmatprep.subr.bf16.mxu0 0
    %1239 = vmatpush1.bf16.msra.mxu0 %v555
    %1240 = vmatprep.subr.bf16.mxu0 0
    %1241 = vmatpush1.bf16.msra.mxu0 %v554
    %1242 = vmatprep.subr.bf16.mxu0 0
    %1243 = vmatpush1.bf16.msra.mxu0 %v553
    %1244 = vmatprep.subr.bf16.mxu0 0
    %1245 = vmatpush2.bf16.msra.mxu0 0
    %1246 = vmatprep.subr.bf16.mxu0 0
    %1247 = vmatpush2.bf16.msra.mxu0 0
    %1248 = vmatprep.subr.bf16.mxu0 0
    %1249 = vmatpush2.bf16.msra.mxu0 0
    %1250 = vmatprep.subr.bf16.mxu0 0
    %1251 = vmatpush2.bf16.msra.mxu0 0
    %1252 = vmatprep.subr.bf16.mxu0 0
    %1253 = vmatpush2.bf16.msra.mxu0 0
    %1254 = vmatprep.subr.bf16.mxu0 0
    %1255 = vmatpush2.bf16.msra.mxu0 0
    %1256 = vmatprep.subr.bf16.mxu0 0
    %1257 = vmatpush2.bf16.msra.mxu0 0
    %1258 = vmatprep.subr.bf16.mxu0 0
    %1259 = vmatpush2.bf16.msra.mxu0 0
    %1260 = vmatprep.mubr.bf16.mxu0 0
    %1261 = vmatmul.mubr.bf16.gmra.mxu0 %v1172
    %v1262 = vpop.f32.mrf.mxu0
    %v1263 = vadd.f32 %v376, %v1262
    %v1264 = vpop.f32.mrf.mxu0
    %v1265 = vpop.f32.mrf.mxu0
    %v1266 = vpop.f32.mrf.mxu0
    %1267 = vdwg.mxu0
    %v1268 = vmul.f32 %v1220, %v1263
    %v1269 = vadd.f32 %v1171, %v1268
    %v1270 = vtanh.pop %v1269
    %v1271 = vsub.f32 %v1163, %v1270
    %v1272 = vmul.f32 %v1227, %v1271
    %v1273 = vadd.f32 %v1270, %v1272
    %s1274 = scalar_lea.vmem [#allocation9], 48
    %1275 = vst [vmem:[%s1274] sm:$0xff] %v1273
    %s1276 = smul.u32 7, 3
    %s1277 = smul.addr %s1276, 8
    %s1278 = scalar_lea.vmem [#allocation3], %s1277
    %v1279 = vld [vmem:[%s1278] sm:$0xff]
    %v1280 = vld [vmem:[%s1278 + $0x8] sm:$0xff]
    %v1281 = vld [vmem:[%s1278 + $0x10] sm:$0xff]
    %v1282 = vpack.c.bf16 %v1273, %v1273
    %1283 = vmatprep.subr.bf16.mxu0 %v449
    %1284 = vmatpush1.bf16.msra.mxu0 %v448
    %1285 = vmatprep.subr.bf16.mxu0 %v447
    %1286 = vmatpush1.bf16.msra.mxu0 %v446
    %1287 = vmatprep.subr.bf16.mxu0 %v445
    %1288 = vmatpush1.bf16.msra.mxu0 %v444
    %1289 = vmatprep.subr.bf16.mxu0 %v443
    %1290 = vmatpush1.bf16.msra.mxu0 %v442
    %1291 = vmatprep.subr.bf16.mxu0 %v441
    %1292 = vmatpush1.bf16.msra.mxu0 %v440
    %1293 = vmatprep.subr.bf16.mxu0 %v439
    %1294 = vmatpush1.bf16.msra.mxu0 %v438
    %1295 = vmatprep.subr.bf16.mxu0 %v437
    %1296 = vmatpush1.bf16.msra.mxu0 %v436
    %1297 = vmatprep.subr.bf16.mxu0 %v435
    %1298 = vmatpush1.bf16.msra.mxu0 %v434
    %1299 = vmatprep.subr.bf16.mxu0 0
    %1300 = vmatpush2.bf16.msra.mxu0 0
    %1301 = vmatprep.subr.bf16.mxu0 0
    %1302 = vmatpush2.bf16.msra.mxu0 0
    %1303 = vmatprep.subr.bf16.mxu0 0
    %1304 = vmatpush2.bf16.msra.mxu0 0
    %1305 = vmatprep.subr.bf16.mxu0 0
    %1306 = vmatpush2.bf16.msra.mxu0 0
    %1307 = vmatprep.subr.bf16.mxu0 0
    %1308 = vmatpush2.bf16.msra.mxu0 0
    %1309 = vmatprep.subr.bf16.mxu0 0
    %1310 = vmatpush2.bf16.msra.mxu0 0
    %1311 = vmatprep.subr.bf16.mxu0 0
    %1312 = vmatpush2.bf16.msra.mxu0 0
    %1313 = vmatprep.subr.bf16.mxu0 0
    %1314 = vmatpush2.bf16.msra.mxu0 0
    %1315 = vmatprep.mubr.bf16.mxu0 0
    %1316 = vmatmul.mubr.bf16.gmra.mxu0 %v1282
    %v1317 = vpop.f32.mrf.mxu0
    %v1318 = vadd.f32 %v364, %v1317
    %v1319 = vpop.f32.mrf.mxu0
    %v1320 = vadd.f32 %v368, %v1319
    %v1321 = vpop.f32.mrf.mxu0
    %v1322 = vpop.f32.mrf.mxu0
    %1323 = vdwg.mxu0
    %v1324 = vadd.f32 %v1279, %v1318
    %v1325 = vxor.u32 %v1324, 2147483648
    %v1326 = vmul.f32 %v1325, 1.442695
    %v1327 = vpow.pop %v1326
    %v1328 = vadd.f32 %v1327, 1.0
    %v1329 = vrcp.pop %v1328
    %v1330 = vmul.f32 1.0, %v1329
    %v1331 = vadd.f32 %v1280, %v1320
    %v1332 = vxor.u32 %v1331, 2147483648
    %v1333 = vmul.f32 %v1332, 1.442695
    %v1334 = vpow.pop %v1333
    %v1335 = vadd.f32 %v1334, 1.0
    %v1336 = vrcp.pop %v1335
    %v1337 = vmul.f32 1.0, %v1336
    %1338 = vmatprep.subr.bf16.mxu0 0
    %1339 = vmatpush1.bf16.msra.mxu0 %v560
    %1340 = vmatprep.subr.bf16.mxu0 0
    %1341 = vmatpush1.bf16.msra.mxu0 %v559
    %1342 = vmatprep.subr.bf16.mxu0 0
    %1343 = vmatpush1.bf16.msra.mxu0 %v558
    %1344 = vmatprep.subr.bf16.mxu0 0
    %1345 = vmatpush1.bf16.msra.mxu0 %v557
    %1346 = vmatprep.subr.bf16.mxu0 0
    %1347 = vmatpush1.bf16.msra.mxu0 %v556
    %1348 = vmatprep.subr.bf16.mxu0 0
    %1349 = vmatpush1.bf16.msra.mxu0 %v555
    %1350 = vmatprep.subr.bf16.mxu0 0
    %1351 = vmatpush1.bf16.msra.mxu0 %v554
    %1352 = vmatprep.subr.bf16.mxu0 0
    %1353 = vmatpush1.bf16.msra.mxu0 %v553
    %1354 = vmatprep.subr.bf16.mxu0 0
    %1355 = vmatpush2.bf16.msra.mxu0 0
    %1356 = vmatprep.subr.bf16.mxu0 0
    %1357 = vmatpush2.bf16.msra.mxu0 0
    %1358 = vmatprep.subr.bf16.mxu0 0
    %1359 = vmatpush2.bf16.msra.mxu0 0
    %1360 = vmatprep.subr.bf16.mxu0 0
    %1361 = vmatpush2.bf16.msra.mxu0 0
    %1362 = vmatprep.subr.bf16.mxu0 0
    %1363 = vmatpush2.bf16.msra.mxu0 0
    %1364 = vmatprep.subr.bf16.mxu0 0
    %1365 = vmatpush2.bf16.msra.mxu0 0
    %1366 = vmatprep.subr.bf16.mxu0 0
    %1367 = vmatpush2.bf16.msra.mxu0 0
    %1368 = vmatprep.subr.bf16.mxu0 0
    %1369 = vmatpush2.bf16.msra.mxu0 0
    %1370 = vmatprep.mubr.bf16.mxu0 0
    %1371 = vmatmul.mubr.bf16.gmra.mxu0 %v1282
    %v1372 = vpop.f32.mrf.mxu0
    %v1373 = vadd.f32 %v376, %v1372
    %v1374 = vpop.f32.mrf.mxu0
    %v1375 = vpop.f32.mrf.mxu0
    %v1376 = vpop.f32.mrf.mxu0
    %1377 = vdwg.mxu0
    %v1378 = vmul.f32 %v1330, %v1373
    %v1379 = vadd.f32 %v1281, %v1378
    %v1380 = vtanh.pop %v1379
    %v1381 = vsub.f32 %v1273, %v1380
    %v1382 = vmul.f32 %v1337, %v1381
    %v1383 = vadd.f32 %v1380, %v1382
    %s1384 = scalar_lea.vmem [#allocation9], 56
    %1385 = vst [vmem:[%s1384] sm:$0xff] %v1383
    %1386 = vst [vmem:[#allocation2] sm:$0xff] %v1383
    // Predicated region
    $region46: #{tpu_custom_call.1} parent=1 // pred_check
      _
    $region47: #{tpu_custom_call.1} parent=1 // pred_check_branch
      %1388 = sbr.rel (0) target = $region49
    $region48: #{tpu_custom_call.1} parent=1 // pred_region
      %s1390 = ssub.s32 1024, 1024
      %1391 = vsyncadd [#allocation6], %s1390
      %s1392 = sshll.u32 [#allocation9], 4
      %s1393 = int_to_ptr.vmem [resolvable:$true] %s1392
      %1398 = dma.vmem_to_hbm [thread:$0]  %s1393, 1024, %s8, [#allocation6], 128, 128, 8
    $region49: #{tpu_custom_call.1} parent=1 // pred_fallthru
      _
    // Predicated region
    $region50: #{tpu_custom_call.1} parent=1 // pred_check
      _
    $region51: #{tpu_custom_call.1} parent=1 // pred_check_branch
      %1400 = sbr.rel (0) target = $region53
    $region52: #{tpu_custom_call.1} parent=1 // pred_region
      %1401 = dma.done [#allocation6], 1024
    $region53: #{tpu_custom_call.1} parent=1 // pred_fallthru
      _
    %1402 = vsyncpa [#allocation5], 1
    %1403 = vsyncpa [#allocation8], 1
    %1404 = vsyncpa [#allocation6], 1

</llo_original>
